<compile_context>
chip_gen: v7x
topology: tpu7x:2x2x1
jax: 0.10.0
libtpu: 0.0.40
codegen_flags: <defaults>
</compile_context>

<pallas_src>
import functools

import jax
import jax.numpy as jnp
from jax.experimental import pallas as pl
from jax.experimental.pallas import tpu as pltpu

# Row layout of the packed per-layer vector operand (L, 8, VW).
_R_BQKV, _R_BO, _R_G1, _R_BE1, _R_G2, _R_BE2, _R_B1, _R_B2 = range(8)


def _layer_norm(x, gamma, beta, eps=1e-5):
    mean = jnp.mean(x, axis=-1, keepdims=True)
    centered = x - mean
    var = jnp.mean(centered * centered, axis=-1, keepdims=True)
    inv = jax.lax.rsqrt(var + eps)
    return centered * inv * gamma + beta


def _stack_kernel(B, S, D, H, FD, training, use_bf16, *refs):
    """One grid step == one transformer layer. Activations live in out_ref."""
    if training:
        (x_ref, mask_ref, wqkv_ref, wo_ref, w1_ref, w2_ref, vecs_ref,
         attn_drop_ref, misc_drop_ref, out_ref) = refs
    else:
        (x_ref, mask_ref, wqkv_ref, wo_ref, w1_ref, w2_ref, vecs_ref,
         out_ref) = refs

    hd = D // H
    cdt = jnp.bfloat16 if use_bf16 else jnp.float32

    def mm(a, b):
        return jnp.dot(a.astype(cdt), b.astype(cdt),
                       preferred_element_type=jnp.float32)

    layer = pl.program_id(0)

    # Layer 0: seed the resident activation block from the input.
    @pl.when(layer == 0)
    def _():
        out_ref[...] = x_ref[...]

    h = out_ref[...].astype(jnp.float32)                 # (B*S, D)

    # Packed per-layer vectors (one operand instead of eight).
    bqkv = vecs_ref[0, _R_BQKV:_R_BQKV + 1, :3 * D]      # (1, 3D)
    bo   = vecs_ref[0, _R_BO:_R_BO + 1, :D]
    g1   = vecs_ref[0, _R_G1:_R_G1 + 1, :D]
    be1  = vecs_ref[0, _R_BE1:_R_BE1 + 1, :D]
    g2   = vecs_ref[0, _R_G2:_R_G2 + 1, :D]
    be2  = vecs_ref[0, _R_BE2:_R_BE2 + 1, :D]
    b1   = vecs_ref[0, _R_B1:_R_B1 + 1, :FD]
    b2   = vecs_ref[0, _R_B2:_R_B2 + 1, :D]

    # ---- fused QKV projection: one (B*S, D) @ (D, 3D) matmul ----
    qkv = (mm(h, wqkv_ref[0]) + bqkv).reshape(B, S, 3 * D)

    mask_add = mask_ref[...][None]                       # (1, S, S), 0 / -1e4
    wo_full = wo_ref[0]                                  # (D, D)

    # ---- attention, per head (unrolled H times at trace time) ----
    # NOTE: no 1/sqrt(d_k) scaling -- faithful to the buggy reference module.
    # Output projection fused into the loop: avoids the lane-axis concat.
    attn_acc = jnp.zeros((B * S, D), jnp.float32)
    for head in range(H):
        lo = head * hd
        qh = qkv[:, :, lo:lo + hd]                       # (B, S, hd)
        kh = qkv[:, :, D + lo:D + lo + hd]
        vh = qkv[:, :, 2 * D + lo:2 * D + lo + hd]

        scores = jnp.einsum('bqd,bkd->bqk', qh.astype(cdt), kh.astype(cdt),
                            preferred_element_type=jnp.float32) + mask_add
        m = jnp.max(scores, axis=-1, keepdims=True)
        e = jnp.exp(scores - m)
        w = e * pl.reciprocal(jnp.sum(e, axis=-1, keepdims=True), approx=True)

        if training:  # attention-weight dropout (p=0.1 in the reference)
            w = w * attn_drop_ref[0, head * B:(head + 1) * B]

        ctx = jnp.einsum('bqk,bkd->bqd', w.astype(cdt), vh.astype(cdt),
                         preferred_element_type=jnp.float32)      # (B, S, hd)
        attn_acc = attn_acc + mm(ctx.reshape(B * S, hd),
                                 wo_full[lo:lo + hd, :])          # (B*S, D)

    attn_out = attn_acc + bo

    # ---- residual dropout + LayerNorm 1 ----
    if training:
        attn_out = attn_out * misc_drop_ref[0, :, FD:FD + D]
    h1 = _layer_norm(h + attn_out, g1, be1)

    # ---- feed-forward: fc1 -> ReLU -> dropout -> fc2 ----
    f = jnp.maximum(mm(h1, w1_ref[0]) + b1, jnp.float32(0.0))
    if training:
        f = f * misc_drop_ref[0, :, :FD]
    ffn_out = mm(f, w2_ref[0]) + b2

    # ---- residual dropout + LayerNorm 2 ----
    if training:
        ffn_out = ffn_out * misc_drop_ref[0, :, FD + D:FD + 2 * D]
    h2 = _layer_norm(h1 + ffn_out, g2, be2)

    out_ref[...] = h2.astype(out_ref.dtype)


def pack_transformer_params(layers_params, *, weights_dtype=jnp.float32):
    """One-time parameter glue (do this at load time, not per forward).

    Each layer is (wq,bq, wk,bk, wv,bv, wo,bo, g1,be1, g2,be2, w1,b1, w2,b2)
    with Linear weights in PyTorch [out_features, in_features] layout.
    """
    D = layers_params[0][0].shape[0]
    FD = layers_params[0][12].shape[0]
    VW = max(3 * D, FD)
    VW = ((VW + 127) // 128) * 128          # lane-pad packed vectors to 128

    wqkv_l, wo_l, w1_l, w2_l, vecs_l = [], [], [], [], []
    for p in layers_params:
        (wq, bq, wk, bk, wv, bv, wo, bo,
         g1, be1, g2, be2, w1, b1, w2, b2) = p
        wqkv_l.append(jnp.concatenate([wq.T, wk.T, wv.T], axis=1))   # (D, 3D)
        wo_l.append(wo.T)
        w1_l.append(w1.T)
        w2_l.append(w2.T)
        v = jnp.zeros((8, VW), jnp.float32)
        v = v.at[_R_BQKV, :3 * D].set(jnp.concatenate([bq, bk, bv]))
        v = v.at[_R_BO, :D].set(bo)
        v = v.at[_R_G1, :D].set(g1)
        v = v.at[_R_BE1, :D].set(be1)
        v = v.at[_R_G2, :D].set(g2)
        v = v.at[_R_BE2, :D].set(be2)
        v = v.at[_R_B1, :FD].set(b1)
        v = v.at[_R_B2, :D].set(b2)
        vecs_l.append(v)

    return {
        'wqkv': jnp.stack(wqkv_l).astype(weights_dtype),   # (L, D, 3D)
        'wo':   jnp.stack(wo_l).astype(weights_dtype),     # (L, D, D)
        'w1':   jnp.stack(w1_l).astype(weights_dtype),     # (L, D, FD)
        'w2':   jnp.stack(w2_l).astype(weights_dtype),     # (L, FD, D)
        'vecs': jnp.stack(vecs_l),                          # (L, 8, VW) f32
    }


def transformer_stack(x, mask, packed, *, num_heads, dropout_p=0.1,
                      attn_dropout_p=0.1, training=False, rng_key=None):
    """Run L stacked TransformerBlocks in a single pallas_call (grid over L)."""
    B, S, D = x.shape
    L, _, FD = packed['w1'].shape
    H = num_heads
    VW = packed['vecs'].shape[-1]
    use_bf16 = packed['wqkv'].dtype == jnp.bfloat16

    # Additive mask built once in the wrapper (0 = attend, -10000 = masked).
    mask_add = jnp.where(mask == 0, jnp.float32(-10000.0), jnp.float32(0.0))

    args = [x.reshape(B * S, D), mask_add,
            packed['wqkv'], packed['wo'], packed['w1'], packed['w2'],
            packed['vecs']]
    in_specs = [
        pl.BlockSpec((B * S, D), lambda l: (0, 0)),             # x (layer 0 only)
        pl.BlockSpec((S, S), lambda l: (0, 0)),                 # additive mask
        pl.BlockSpec((1, D, 3 * D), lambda l: (l, 0, 0)),       # fused QKV weight
        pl.BlockSpec((1, D, D), lambda l: (l, 0, 0)),           # out-proj weight
        pl.BlockSpec((1, D, FD), lambda l: (l, 0, 0)),          # fc1 weight
        pl.BlockSpec((1, FD, D), lambda l: (l, 0, 0)),          # fc2 weight
        pl.BlockSpec((1, 8, VW), lambda l: (l, 0, 0)),          # packed vectors
    ]

    if training:
        # Host-side Bernoulli keep-multipliers (see TODOs in the header).
        if rng_key is None:
            rng_key = jax.random.PRNGKey(0)
        k0, k1 = jax.random.split(rng_key)

        def keep_mult(key, shape, p):
            if p <= 0.0:
                return jnp.ones(shape, jnp.float32)
            kb = jax.random.bernoulli(key, 1.0 - p, shape)
            return kb.astype(jnp.float32) * jnp.float32(1.0 / (1.0 - p))

        attn_drop = keep_mult(k0, (L, H, B, S, S),
                              attn_dropout_p).reshape(L, H * B, S, S)
        ffn_d = keep_mult(jax.random.fold_in(k1, 0), (L, B * S, FD), dropout_p)
        res1d = keep_mult(jax.random.fold_in(k1, 1), (L, B * S, D), dropout_p)
        res2d = keep_mult(jax.random.fold_in(k1, 2), (L, B * S, D), dropout_p)
        misc_drop = jnp.concatenate([ffn_d, res1d, res2d], axis=-1)

        args += [attn_drop, misc_drop]
        in_specs += [
            pl.BlockSpec((1, H * B, S, S), lambda l: (l, 0, 0, 0)),
            pl.BlockSpec((1, B * S, FD + 2 * D), lambda l: (l, 0, 0)),
        ]

    kernel = functools.partial(_stack_kernel, B, S, D, H, FD,
                               bool(training), bool(use_bf16))

    out2d = pl.pallas_call(
        kernel,
        out_shape=jax.ShapeDtypeStruct((B * S, D), x.dtype),
        grid_spec=pltpu.PrefetchScalarGridSpec(
            num_scalar_prefetch=0,
            grid=(L,),
            in_specs=in_specs,
            # Constant block index => activations stay resident in VMEM across
            # all L layers and are written back to HBM once at the end.
            out_specs=pl.BlockSpec((B * S, D), lambda l: (0, 0)),
        ),
        # Layers are sequential.  TODO(synk): once batch/seq grow, add a
        # "parallel" batch/token grid axis so v7x's 2 TensorCores split work.
        compiler_params=pltpu.CompilerParams(
            dimension_semantics=("arbitrary",)),
    )(*args)
    return out2d.reshape(B, S, D)


def transformer_block(x, mask, params, *, num_heads, dropout_p=0.1,
                      attn_dropout_p=0.1, training=False, rng_key=None,
                      use_bf16_matmul=False):
    """Single-layer convenience wrapper (packs params per call; for repeated
    use pack once with pack_transformer_params and call transformer_stack)."""
    packed = pack_transformer_params(
        [params],
        weights_dtype=jnp.bfloat16 if use_bf16_matmul else jnp.float32)
    return transformer_stack(x, mask, packed, num_heads=num_heads,
                             dropout_p=dropout_p,
                             attn_dropout_p=attn_dropout_p,
                             training=training, rng_key=rng_key)


# ------------------------- pure-JAX reference -------------------------------
def _layer_norm_ref(x, gamma, beta, eps=1e-5):
    mean = jnp.mean(x, axis=-1, keepdims=True)
    var = jnp.mean((x - mean) ** 2, axis=-1, keepdims=True)
    return (x - mean) / jnp.sqrt(var + eps) * gamma + beta


def ref_transformer_block_no_dropout(x, mask, params, num_heads):
    """Forward of the (buggy) module with all dropout disabled."""
    (wq, bq, wk, bk, wv, bv, wo, bo,
     g1, be1, g2, be2, w1, b1, w2, b2) = params
    B, S, D = x.shape
    hd = D // num_heads

    def proj(w, b):
        return (x @ w.T + b).reshape(B, S, num_heads, hd).transpose(0, 2, 1, 3)

    q, k, v = proj(wq, bq), proj(wk, bk), proj(wv, bv)
    scores = q @ jnp.swapaxes(k, -1, -2)              # no 1/sqrt(d_k) scaling
    scores = jnp.where(mask[None, None] == 0, -10000.0, scores)
    w_ = jax.nn.softmax(scores, axis=-1)
    ctx = (w_ @ v).transpose(0, 2, 1, 3).reshape(B, S, D)
    attn_out = ctx @ wo.T + bo
    h = _layer_norm_ref(x + attn_out, g1, be1)
    f = jnp.maximum(h @ w1.T + b1, 0.0)
    ffn_out = f @ w2.T + b2
    h = _layer_norm_ref(h + ffn_out, g2, be2)
    return h


if __name__ == "__main__":
    B, S, D, H, FD, L = 2, 8, 32, 4, 128, 3

    key = jax.random.PRNGKey(0)
    kx, kp = jax.random.split(key)
    x = jax.random.normal(kx, (B, S, D), dtype=jnp.float32)

    def make_layer(lkey):
        ks = jax.random.split(lkey, 16)

        def lin(kw, kb, fo, fi):
            w = 0.02 * jax.random.normal(kw, (fo, fi), dtype=jnp.float32)
            b = 0.01 * jax.random.normal(kb, (fo,), dtype=jnp.float32)
            return w, b

        wq, bq = lin(ks[0], ks[1], D, D)
        wk, bk = lin(ks[2], ks[3], D, D)
        wv, bv = lin(ks[4], ks[5], D, D)
        wo, bo = lin(ks[6], ks[7], D, D)
        w1, b1 = lin(ks[8], ks[9], FD, D)
        w2, b2 = lin(ks[10], ks[11], D, FD)
        g1 = 1.0 + 0.1 * jax.random.normal(ks[12], (D,), dtype=jnp.float32)
        be1 = 0.05 * jax.random.normal(ks[13], (D,), dtype=jnp.float32)
        g2 = 1.0 + 0.1 * jax.random.normal(ks[14], (D,), dtype=jnp.float32)
        be2 = 0.05 * jax.random.normal(ks[15], (D,), dtype=jnp.float32)
        return (wq, bq, wk, bk, wv, bv, wo, bo,
                g1, be1, g2, be2, w1, b1, w2, b2)

    layer_keys = jax.random.split(kp, L)
    layers = [make_layer(k) for k in layer_keys]

    # Causal mask (S, S): 1 = attend, 0 = masked.
    mask = jnp.tril(jnp.ones((S, S), dtype=jnp.float32))

    # --- single TransformerBlock, eval mode, vs pure-JAX reference ---
    out1 = transformer_block(x, mask, layers[0], num_heads=H, training=False)
    ref1 = ref_transformer_block_no_dropout(x, mask, layers[0], H)
    # 2e-3 tolerance accounts for the approximate EUP reciprocal in softmax.
    assert jnp.allclose(out1, ref1, atol=2e-3, rtol=2e-3), "1-layer mismatch"

    # --- L=3 layers fused into one pallas_call, eval mode, vs reference ---
    packed = pack_transformer_params(layers)
    outL = transformer_stack(x, mask, packed, num_heads=H, training=False)
    refL = x
    for p in layers:
        refL = ref_transformer_block_no_dropout(refL, mask, p, H)
    assert jnp.allclose(outL, refL, atol=2e-3, rtol=2e-3), "stack mismatch"

    # --- training-mode smoke test (attention + residual/FFN dropout) ---
    out_train = transformer_stack(x, mask, packed, num_heads=H,
                                  dropout_p=0.1, attn_dropout_p=0.1,
                                  training=True,
                                  rng_key=jax.random.PRNGKey(1234))
    jax.block_until_ready(out_train)
    assert out_train.shape == (B, S, D)

    # --- optional bf16-MXU-operand path (weights pre-cast at pack time) ---
    packed_bf16 = pack_transformer_params(layers, weights_dtype=jnp.bfloat16)
    out_bf16 = transformer_stack(x, mask, packed_bf16, num_heads=H,
                                 training=False)
    jax.block_until_ready(out_bf16)
    assert out_bf16.shape == (B, S, D)

    print("KERNEL_OK")
</pallas_src>

<mosaic_0001>
module attributes {stable_mosaic.version = 11 : i64} {
  func.func @_stack_kernel(%arg0: i32, %arg1: memref<16x32xf32, #tpu.memory_space<vmem>>, %arg2: memref<8x8xf32, #tpu.memory_space<vmem>>, %arg3: memref<1x32x96xf32, #tpu.memory_space<vmem>>, %arg4: memref<1x32x32xf32, #tpu.memory_space<vmem>>, %arg5: memref<1x32x128xf32, #tpu.memory_space<vmem>>, %arg6: memref<1x128x32xf32, #tpu.memory_space<vmem>>, %arg7: memref<1x8x128xf32, #tpu.memory_space<vmem>>, %arg8: memref<16x32xf32, #tpu.memory_space<vmem>>) attributes {dimension_semantics = [#tpu.dimension_semantics<arbitrary>], iteration_bounds = array<i64: 1>, scalar_prefetch = 0 : i64, scratch_operands = 0 : i64, tpu.core_type = #tpu.core_type<tc>, window_params = [{pipeline_mode = #tpu.pipeline_mode<synchronous>, transform_indices = @transform_0, window_bounds = array<i64: 16, 32>}, {pipeline_mode = #tpu.pipeline_mode<synchronous>, transform_indices = @transform_1, window_bounds = array<i64: 8, 8>}, {transform_indices = @transform_2, window_bounds = array<i64: 1, 32, 96>}, {transform_indices = @transform_3, window_bounds = array<i64: 1, 32, 32>}, {transform_indices = @transform_4, window_bounds = array<i64: 1, 32, 128>}, {transform_indices = @transform_5, window_bounds = array<i64: 1, 128, 32>}, {transform_indices = @transform_6, window_bounds = array<i64: 1, 8, 128>}, {pipeline_mode = #tpu.pipeline_mode<synchronous>, transform_indices = @transform_7, window_bounds = array<i64: 16, 32>}]} {
    %c0_i32 = arith.constant 0 : i32
    %0 = arith.cmpi eq, %arg0, %c0_i32 : i32
    %1 = arith.extui %0 : i1 to i32
    %c0_i32_0 = arith.constant 0 : i32
    %2 = arith.cmpi ne, %1, %c0_i32_0 : i32
    scf.if %2 {
      %c0_69 = arith.constant 0 : index
      %c0_70 = arith.constant 0 : index
      %172 = vector.load %arg1[%c0_69, %c0_70] : memref<16x32xf32, #tpu.memory_space<vmem>>, vector<16x32xf32>
      %c0_71 = arith.constant 0 : index
      %c0_72 = arith.constant 0 : index
      %173 = vector.load %arg8[%c0_71, %c0_72] : memref<16x32xf32, #tpu.memory_space<vmem>>, vector<16x32xf32>
      tpu.vector_store %arg8[%c0_71, %c0_72], %172 {strides = array<i32>} : memref<16x32xf32, #tpu.memory_space<vmem>>, vector<16x32xf32>,
    } else {
    }
    %c0 = arith.constant 0 : index
    %c0_1 = arith.constant 0 : index
    %3 = vector.load %arg8[%c0, %c0_1] : memref<16x32xf32, #tpu.memory_space<vmem>>, vector<16x32xf32>
    %c0_2 = arith.constant 0 : index
    %c0_3 = arith.constant 0 : index
    %c0_4 = arith.constant 0 : index
    %4 = vector.load %arg7[%c0_2, %c0_3, %c0_4] : memref<1x8x128xf32, #tpu.memory_space<vmem>>, vector<1x1x96xf32>
    %5 = vector.shape_cast %4 : vector<1x1x96xf32> to vector<1x96xf32>
    %c0_5 = arith.constant 0 : index
    %c1 = arith.constant 1 : index
    %c0_6 = arith.constant 0 : index
    %6 = vector.load %arg7[%c0_5, %c1, %c0_6] : memref<1x8x128xf32, #tpu.memory_space<vmem>>, vector<1x1x32xf32>
    %7 = vector.shape_cast %6 : vector<1x1x32xf32> to vector<1x32xf32>
    %c0_7 = arith.constant 0 : index
    %c2 = arith.constant 2 : index
    %c0_8 = arith.constant 0 : index
    %8 = vector.load %arg7[%c0_7, %c2, %c0_8] : memref<1x8x128xf32, #tpu.memory_space<vmem>>, vector<1x1x32xf32>
    %9 = vector.shape_cast %8 : vector<1x1x32xf32> to vector<1x32xf32>
    %c0_9 = arith.constant 0 : index
    %c3 = arith.constant 3 : index
    %c0_10 = arith.constant 0 : index
    %10 = vector.load %arg7[%c0_9, %c3, %c0_10] : memref<1x8x128xf32, #tpu.memory_space<vmem>>, vector<1x1x32xf32>
    %11 = vector.shape_cast %10 : vector<1x1x32xf32> to vector<1x32xf32>
    %c0_11 = arith.constant 0 : index
    %c4 = arith.constant 4 : index
    %c0_12 = arith.constant 0 : index
    %12 = vector.load %arg7[%c0_11, %c4, %c0_12] : memref<1x8x128xf32, #tpu.memory_space<vmem>>, vector<1x1x32xf32>
    %13 = vector.shape_cast %12 : vector<1x1x32xf32> to vector<1x32xf32>
    %c0_13 = arith.constant 0 : index
    %c5 = arith.constant 5 : index
    %c0_14 = arith.constant 0 : index
    %14 = vector.load %arg7[%c0_13, %c5, %c0_14] : memref<1x8x128xf32, #tpu.memory_space<vmem>>, vector<1x1x32xf32>
    %15 = vector.shape_cast %14 : vector<1x1x32xf32> to vector<1x32xf32>
    %c0_15 = arith.constant 0 : index
    %c6 = arith.constant 6 : index
    %c0_16 = arith.constant 0 : index
    %16 = vector.load %arg7[%c0_15, %c6, %c0_16] : memref<1x8x128xf32, #tpu.memory_space<vmem>>, vector<1x1x128xf32>
    %17 = vector.shape_cast %16 : vector<1x1x128xf32> to vector<1x128xf32>
    %c0_17 = arith.constant 0 : index
    %c7 = arith.constant 7 : index
    %c0_18 = arith.constant 0 : index
    %18 = vector.load %arg7[%c0_17, %c7, %c0_18] : memref<1x8x128xf32, #tpu.memory_space<vmem>>, vector<1x1x32xf32>
    %19 = vector.shape_cast %18 : vector<1x1x32xf32> to vector<1x32xf32>
    %c0_19 = arith.constant 0 : index
    %c0_20 = arith.constant 0 : index
    %c0_21 = arith.constant 0 : index
    %20 = vector.load %arg3[%c0_19, %c0_20, %c0_21] : memref<1x32x96xf32, #tpu.memory_space<vmem>>, vector<1x32x96xf32>
    %21 = vector.shape_cast %20 : vector<1x32x96xf32> to vector<32x96xf32>
    %cst = arith.constant dense<0.000000e+00> : vector<16x96xf32>
    %22 = tpu.matmul %3, %21, %cst {dimension_numbers = #tpu.dot_dimension_numbers<[1], [0], [0], [1], [0, 0, 1, 1], [], []>} : vector<16x32xf32>, vector<32x96xf32>, vector<16x96xf32> -> vector<16x96xf32>
    %23 = vector.broadcast %5 : vector<1x96xf32> to vector<16x96xf32>
    %24 = arith.addf %22, %23 : vector<16x96xf32>
    %25 = vector.shape_cast %24 : vector<16x96xf32> to vector<2x8x96xf32>
    %c0_22 = arith.constant 0 : index
    %c0_23 = arith.constant 0 : index
    %26 = vector.load %arg2[%c0_22, %c0_23] : memref<8x8xf32, #tpu.memory_space<vmem>>, vector<8x8xf32>
    %27 = vector.shape_cast %26 : vector<8x8xf32> to vector<1x8x8xf32>
    %c0_24 = arith.constant 0 : index
    %c0_25 = arith.constant 0 : index
    %c0_26 = arith.constant 0 : index
    %28 = vector.load %arg4[%c0_24, %c0_25, %c0_26] : memref<1x32x32xf32, #tpu.memory_space<vmem>>, vector<1x32x32xf32>
    %29 = vector.shape_cast %28 : vector<1x32x32xf32> to vector<32x32xf32>
    %cst_27 = arith.constant 0.000000e+00 : f32
    %30 = vector.broadcast %cst_27 : f32 to vector<16x32xf32>
    %31 = vector.extract_strided_slice %25 {offsets = [0, 0, 0], sizes = [2, 8, 8], strides = [1, 1, 1]} : vector<2x8x96xf32> to vector<2x8x8xf32>
    %32 = vector.extract_strided_slice %25 {offsets = [0, 0, 32], sizes = [2, 8, 8], strides = [1, 1, 1]} : vector<2x8x96xf32> to vector<2x8x8xf32>
    %33 = vector.extract_strided_slice %25 {offsets = [0, 0, 64], sizes = [2, 8, 8], strides = [1, 1, 1]} : vector<2x8x96xf32> to vector<2x8x8xf32>
    "tpu.trace_start"() <{level = 10 : i32, message = "bqd,bkd->bqk"}> : () -> ()
    %cst_28 = arith.constant dense<0.000000e+00> : vector<2x8x8xf32>
    %34 = tpu.matmul %31, %32, %cst_28 {dimension_numbers = #tpu.dot_dimension_numbers<[2], [2], [1], [1], [0, 0, 0, 1, 1, 1], [0], [0]>} : vector<2x8x8xf32>, vector<2x8x8xf32>, vector<2x8x8xf32> -> vector<2x8x8xf32>
    "tpu.trace_stop"() : () -> ()
    %35 = vector.broadcast %27 : vector<1x8x8xf32> to vector<2x8x8xf32>
    %36 = arith.addf %34, %35 : vector<2x8x8xf32>
    %cst_29 = arith.constant dense<0xFF800000> : vector<2x8xf32>
    %37 = vector.multi_reduction <maximumf>, %36, %cst_29 [2] : vector<2x8x8xf32> to vector<2x8xf32>
    %38 = vector.shape_cast %37 : vector<2x8xf32> to vector<2x8x1xf32>
    %39 = vector.broadcast %38 : vector<2x8x1xf32> to vector<2x8x8xf32>
    %40 = arith.subf %36, %39 : vector<2x8x8xf32>
    %41 = math.exp %40 : vector<2x8x8xf32>
    %cst_30 = arith.constant dense<0.000000e+00> : vector<2x8xf32>
    %42 = vector.multi_reduction <add>, %41, %cst_30 [2] : vector<2x8x8xf32> to vector<2x8xf32>
    %43 = vector.shape_cast %42 : vector<2x8xf32> to vector<2x8x1xf32>
    %44 = tpu.reciprocal %43 {approx = true} : vector<2x8x1xf32> -> vector<2x8x1xf32>
    %45 = vector.broadcast %44 : vector<2x8x1xf32> to vector<2x8x8xf32>
    %46 = arith.mulf %41, %45 : vector<2x8x8xf32>
    "tpu.trace_start"() <{level = 10 : i32, message = "bqk,bkd->bqd"}> : () -> ()
    %cst_31 = arith.constant dense<0.000000e+00> : vector<2x8x8xf32>
    %47 = tpu.matmul %46, %33, %cst_31 {dimension_numbers = #tpu.dot_dimension_numbers<[2], [1], [1], [2], [0, 0, 0, 1, 1, 2], [0], [0]>} : vector<2x8x8xf32>, vector<2x8x8xf32>, vector<2x8x8xf32> -> vector<2x8x8xf32>
    "tpu.trace_stop"() : () -> ()
    %48 = vector.shape_cast %47 : vector<2x8x8xf32> to vector<16x8xf32>
    %49 = vector.extract_strided_slice %29 {offsets = [0, 0], sizes = [8, 32], strides = [1, 1]} : vector<32x32xf32> to vector<8x32xf32>
    %cst_32 = arith.constant dense<0.000000e+00> : vector<16x32xf32>
    %50 = tpu.matmul %48, %49, %cst_32 {dimension_numbers = #tpu.dot_dimension_numbers<[1], [0], [0], [1], [0, 0, 1, 1], [], []>} : vector<16x8xf32>, vector<8x32xf32>, vector<16x32xf32> -> vector<16x32xf32>
    %51 = arith.addf %30, %50 : vector<16x32xf32>
    %52 = vector.extract_strided_slice %25 {offsets = [0, 0, 8], sizes = [2, 8, 8], strides = [1, 1, 1]} : vector<2x8x96xf32> to vector<2x8x8xf32>
    %53 = vector.extract_strided_slice %25 {offsets = [0, 0, 40], sizes = [2, 8, 8], strides = [1, 1, 1]} : vector<2x8x96xf32> to vector<2x8x8xf32>
    %54 = vector.extract_strided_slice %25 {offsets = [0, 0, 72], sizes = [2, 8, 8], strides = [1, 1, 1]} : vector<2x8x96xf32> to vector<2x8x8xf32>
    "tpu.trace_start"() <{level = 10 : i32, message = "bqd,bkd->bqk"}> : () -> ()
    %cst_33 = arith.constant dense<0.000000e+00> : vector<2x8x8xf32>
    %55 = tpu.matmul %52, %53, %cst_33 {dimension_numbers = #tpu.dot_dimension_numbers<[2], [2], [1], [1], [0, 0, 0, 1, 1, 1], [0], [0]>} : vector<2x8x8xf32>, vector<2x8x8xf32>, vector<2x8x8xf32> -> vector<2x8x8xf32>
    "tpu.trace_stop"() : () -> ()
    %56 = vector.broadcast %27 : vector<1x8x8xf32> to vector<2x8x8xf32>
    %57 = arith.addf %55, %56 : vector<2x8x8xf32>
    %cst_34 = arith.constant dense<0xFF800000> : vector<2x8xf32>
    %58 = vector.multi_reduction <maximumf>, %57, %cst_34 [2] : vector<2x8x8xf32> to vector<2x8xf32>
    %59 = vector.shape_cast %58 : vector<2x8xf32> to vector<2x8x1xf32>
    %60 = vector.broadcast %59 : vector<2x8x1xf32> to vector<2x8x8xf32>
    %61 = arith.subf %57, %60 : vector<2x8x8xf32>
    %62 = math.exp %61 : vector<2x8x8xf32>
    %cst_35 = arith.constant dense<0.000000e+00> : vector<2x8xf32>
    %63 = vector.multi_reduction <add>, %62, %cst_35 [2] : vector<2x8x8xf32> to vector<2x8xf32>
    %64 = vector.shape_cast %63 : vector<2x8xf32> to vector<2x8x1xf32>
    %65 = tpu.reciprocal %64 {approx = true} : vector<2x8x1xf32> -> vector<2x8x1xf32>
    %66 = vector.broadcast %65 : vector<2x8x1xf32> to vector<2x8x8xf32>
    %67 = arith.mulf %62, %66 : vector<2x8x8xf32>
    "tpu.trace_start"() <{level = 10 : i32, message = "bqk,bkd->bqd"}> : () -> ()
    %cst_36 = arith.constant dense<0.000000e+00> : vector<2x8x8xf32>
    %68 = tpu.matmul %67, %54, %cst_36 {dimension_numbers = #tpu.dot_dimension_numbers<[2], [1], [1], [2], [0, 0, 0, 1, 1, 2], [0], [0]>} : vector<2x8x8xf32>, vector<2x8x8xf32>, vector<2x8x8xf32> -> vector<2x8x8xf32>
    "tpu.trace_stop"() : () -> ()
    %69 = vector.shape_cast %68 : vector<2x8x8xf32> to vector<16x8xf32>
    %70 = vector.extract_strided_slice %29 {offsets = [8, 0], sizes = [8, 32], strides = [1, 1]} : vector<32x32xf32> to vector<8x32xf32>
    %cst_37 = arith.constant dense<0.000000e+00> : vector<16x32xf32>
    %71 = tpu.matmul %69, %70, %cst_37 {dimension_numbers = #tpu.dot_dimension_numbers<[1], [0], [0], [1], [0, 0, 1, 1], [], []>} : vector<16x8xf32>, vector<8x32xf32>, vector<16x32xf32> -> vector<16x32xf32>
    %72 = arith.addf %51, %71 : vector<16x32xf32>
    %73 = vector.extract_strided_slice %25 {offsets = [0, 0, 16], sizes = [2, 8, 8], strides = [1, 1, 1]} : vector<2x8x96xf32> to vector<2x8x8xf32>
    %74 = vector.extract_strided_slice %25 {offsets = [0, 0, 48], sizes = [2, 8, 8], strides = [1, 1, 1]} : vector<2x8x96xf32> to vector<2x8x8xf32>
    %75 = vector.extract_strided_slice %25 {offsets = [0, 0, 80], sizes = [2, 8, 8], strides = [1, 1, 1]} : vector<2x8x96xf32> to vector<2x8x8xf32>
    "tpu.trace_start"() <{level = 10 : i32, message = "bqd,bkd->bqk"}> : () -> ()
    %cst_38 = arith.constant dense<0.000000e+00> : vector<2x8x8xf32>
    %76 = tpu.matmul %73, %74, %cst_38 {dimension_numbers = #tpu.dot_dimension_numbers<[2], [2], [1], [1], [0, 0, 0, 1, 1, 1], [0], [0]>} : vector<2x8x8xf32>, vector<2x8x8xf32>, vector<2x8x8xf32> -> vector<2x8x8xf32>
    "tpu.trace_stop"() : () -> ()
    %77 = vector.broadcast %27 : vector<1x8x8xf32> to vector<2x8x8xf32>
    %78 = arith.addf %76, %77 : vector<2x8x8xf32>
    %cst_39 = arith.constant dense<0xFF800000> : vector<2x8xf32>
    %79 = vector.multi_reduction <maximumf>, %78, %cst_39 [2] : vector<2x8x8xf32> to vector<2x8xf32>
    %80 = vector.shape_cast %79 : vector<2x8xf32> to vector<2x8x1xf32>
    %81 = vector.broadcast %80 : vector<2x8x1xf32> to vector<2x8x8xf32>
    %82 = arith.subf %78, %81 : vector<2x8x8xf32>
    %83 = math.exp %82 : vector<2x8x8xf32>
    %cst_40 = arith.constant dense<0.000000e+00> : vector<2x8xf32>
    %84 = vector.multi_reduction <add>, %83, %cst_40 [2] : vector<2x8x8xf32> to vector<2x8xf32>
    %85 = vector.shape_cast %84 : vector<2x8xf32> to vector<2x8x1xf32>
    %86 = tpu.reciprocal %85 {approx = true} : vector<2x8x1xf32> -> vector<2x8x1xf32>
    %87 = vector.broadcast %86 : vector<2x8x1xf32> to vector<2x8x8xf32>
    %88 = arith.mulf %83, %87 : vector<2x8x8xf32>
    "tpu.trace_start"() <{level = 10 : i32, message = "bqk,bkd->bqd"}> : () -> ()
    %cst_41 = arith.constant dense<0.000000e+00> : vector<2x8x8xf32>
    %89 = tpu.matmul %88, %75, %cst_41 {dimension_numbers = #tpu.dot_dimension_numbers<[2], [1], [1], [2], [0, 0, 0, 1, 1, 2], [0], [0]>} : vector<2x8x8xf32>, vector<2x8x8xf32>, vector<2x8x8xf32> -> vector<2x8x8xf32>
    "tpu.trace_stop"() : () -> ()
    %90 = vector.shape_cast %89 : vector<2x8x8xf32> to vector<16x8xf32>
    %91 = vector.extract_strided_slice %29 {offsets = [16, 0], sizes = [8, 32], strides = [1, 1]} : vector<32x32xf32> to vector<8x32xf32>
    %cst_42 = arith.constant dense<0.000000e+00> : vector<16x32xf32>
    %92 = tpu.matmul %90, %91, %cst_42 {dimension_numbers = #tpu.dot_dimension_numbers<[1], [0], [0], [1], [0, 0, 1, 1], [], []>} : vector<16x8xf32>, vector<8x32xf32>, vector<16x32xf32> -> vector<16x32xf32>
    %93 = arith.addf %72, %92 : vector<16x32xf32>
    %94 = vector.extract_strided_slice %25 {offsets = [0, 0, 24], sizes = [2, 8, 8], strides = [1, 1, 1]} : vector<2x8x96xf32> to vector<2x8x8xf32>
    %95 = vector.extract_strided_slice %25 {offsets = [0, 0, 56], sizes = [2, 8, 8], strides = [1, 1, 1]} : vector<2x8x96xf32> to vector<2x8x8xf32>
    %96 = vector.extract_strided_slice %25 {offsets = [0, 0, 88], sizes = [2, 8, 8], strides = [1, 1, 1]} : vector<2x8x96xf32> to vector<2x8x8xf32>
    "tpu.trace_start"() <{level = 10 : i32, message = "bqd,bkd->bqk"}> : () -> ()
    %cst_43 = arith.constant dense<0.000000e+00> : vector<2x8x8xf32>
    %97 = tpu.matmul %94, %95, %cst_43 {dimension_numbers = #tpu.dot_dimension_numbers<[2], [2], [1], [1], [0, 0, 0, 1, 1, 1], [0], [0]>} : vector<2x8x8xf32>, vector<2x8x8xf32>, vector<2x8x8xf32> -> vector<2x8x8xf32>
    "tpu.trace_stop"() : () -> ()
    %98 = vector.broadcast %27 : vector<1x8x8xf32> to vector<2x8x8xf32>
    %99 = arith.addf %97, %98 : vector<2x8x8xf32>
    %cst_44 = arith.constant dense<0xFF800000> : vector<2x8xf32>
    %100 = vector.multi_reduction <maximumf>, %99, %cst_44 [2] : vector<2x8x8xf32> to vector<2x8xf32>
    %101 = vector.shape_cast %100 : vector<2x8xf32> to vector<2x8x1xf32>
    %102 = vector.broadcast %101 : vector<2x8x1xf32> to vector<2x8x8xf32>
    %103 = arith.subf %99, %102 : vector<2x8x8xf32>
    %104 = math.exp %103 : vector<2x8x8xf32>
    %cst_45 = arith.constant dense<0.000000e+00> : vector<2x8xf32>
    %105 = vector.multi_reduction <add>, %104, %cst_45 [2] : vector<2x8x8xf32> to vector<2x8xf32>
    %106 = vector.shape_cast %105 : vector<2x8xf32> to vector<2x8x1xf32>
    %107 = tpu.reciprocal %106 {approx = true} : vector<2x8x1xf32> -> vector<2x8x1xf32>
    %108 = vector.broadcast %107 : vector<2x8x1xf32> to vector<2x8x8xf32>
    %109 = arith.mulf %104, %108 : vector<2x8x8xf32>
    "tpu.trace_start"() <{level = 10 : i32, message = "bqk,bkd->bqd"}> : () -> ()
    %cst_46 = arith.constant dense<0.000000e+00> : vector<2x8x8xf32>
    %110 = tpu.matmul %109, %96, %cst_46 {dimension_numbers = #tpu.dot_dimension_numbers<[2], [1], [1], [2], [0, 0, 0, 1, 1, 2], [0], [0]>} : vector<2x8x8xf32>, vector<2x8x8xf32>, vector<2x8x8xf32> -> vector<2x8x8xf32>
    "tpu.trace_stop"() : () -> ()
    %111 = vector.shape_cast %110 : vector<2x8x8xf32> to vector<16x8xf32>
    %112 = vector.extract_strided_slice %29 {offsets = [24, 0], sizes = [8, 32], strides = [1, 1]} : vector<32x32xf32> to vector<8x32xf32>
    %cst_47 = arith.constant dense<0.000000e+00> : vector<16x32xf32>
    %113 = tpu.matmul %111, %112, %cst_47 {dimension_numbers = #tpu.dot_dimension_numbers<[1], [0], [0], [1], [0, 0, 1, 1], [], []>} : vector<16x8xf32>, vector<8x32xf32>, vector<16x32xf32> -> vector<16x32xf32>
    %114 = arith.addf %93, %113 : vector<16x32xf32>
    %115 = vector.broadcast %7 : vector<1x32xf32> to vector<16x32xf32>
    %116 = arith.addf %114, %115 : vector<16x32xf32>
    %117 = arith.addf %3, %116 : vector<16x32xf32>
    %cst_48 = arith.constant dense<0.000000e+00> : vector<16xf32>
    %118 = vector.multi_reduction <add>, %117, %cst_48 [1] : vector<16x32xf32> to vector<16xf32>
    %119 = vector.shape_cast %118 : vector<16xf32> to vector<16x1xf32>
    %cst_49 = arith.constant 3.200000e+01 : f32
    %120 = vector.broadcast %cst_49 : f32 to vector<16x1xf32>
    %121 = arith.divf %119, %120 : vector<16x1xf32>
    %122 = vector.broadcast %121 : vector<16x1xf32> to vector<16x32xf32>
    %123 = arith.subf %117, %122 : vector<16x32xf32>
    %124 = arith.mulf %123, %123 : vector<16x32xf32>
    %cst_50 = arith.constant dense<0.000000e+00> : vector<16xf32>
    %125 = vector.multi_reduction <add>, %124, %cst_50 [1] : vector<16x32xf32> to vector<16xf32>
    %126 = vector.shape_cast %125 : vector<16xf32> to vector<16x1xf32>
    %cst_51 = arith.constant 3.200000e+01 : f32
    %127 = vector.broadcast %cst_51 : f32 to vector<16x1xf32>
    %128 = arith.divf %126, %127 : vector<16x1xf32>
    %cst_52 = arith.constant 9.99999974E-6 : f32
    %129 = vector.broadcast %cst_52 : f32 to vector<16x1xf32>
    %130 = arith.addf %128, %129 : vector<16x1xf32>
    %131 = math.rsqrt %130 : vector<16x1xf32>
    %132 = vector.broadcast %131 : vector<16x1xf32> to vector<16x32xf32>
    %133 = arith.mulf %123, %132 : vector<16x32xf32>
    %134 = vector.broadcast %9 : vector<1x32xf32> to vector<16x32xf32>
    %135 = arith.mulf %133, %134 : vector<16x32xf32>
    %136 = vector.broadcast %11 : vector<1x32xf32> to vector<16x32xf32>
    %137 = arith.addf %135, %136 : vector<16x32xf32>
    %c0_53 = arith.constant 0 : index
    %c0_54 = arith.constant 0 : index
    %c0_55 = arith.constant 0 : index
    %138 = vector.load %arg5[%c0_53, %c0_54, %c0_55] : memref<1x32x128xf32, #tpu.memory_space<vmem>>, vector<1x32x128xf32>
    %139 = vector.shape_cast %138 : vector<1x32x128xf32> to vector<32x128xf32>
    %cst_56 = arith.constant dense<0.000000e+00> : vector<16x128xf32>
    %140 = tpu.matmul %137, %139, %cst_56 {dimension_numbers = #tpu.dot_dimension_numbers<[1], [0], [0], [1], [0, 0, 1, 1], [], []>} : vector<16x32xf32>, vector<32x128xf32>, vector<16x128xf32> -> vector<16x128xf32>
    %141 = vector.broadcast %17 : vector<1x128xf32> to vector<16x128xf32>
    %142 = arith.addf %140, %141 : vector<16x128xf32>
    %cst_57 = arith.constant 0.000000e+00 : f32
    %143 = vector.broadcast %cst_57 : f32 to vector<16x128xf32>
    %144 = arith.maximumf %142, %143 : vector<16x128xf32>
    %c0_58 = arith.constant 0 : index
    %c0_59 = arith.constant 0 : index
    %c0_60 = arith.constant 0 : index
    %145 = vector.load %arg6[%c0_58, %c0_59, %c0_60] : memref<1x128x32xf32, #tpu.memory_space<vmem>>, vector<1x128x32xf32>
    %146 = vector.shape_cast %145 : vector<1x128x32xf32> to vector<128x32xf32>
    %cst_61 = arith.constant dense<0.000000e+00> : vector<16x32xf32>
    %147 = tpu.matmul %144, %146, %cst_61 {dimension_numbers = #tpu.dot_dimension_numbers<[1], [0], [0], [1], [0, 0, 1, 1], [], []>} : vector<16x128xf32>, vector<128x32xf32>, vector<16x32xf32> -> vector<16x32xf32>
    %148 = vector.broadcast %19 : vector<1x32xf32> to vector<16x32xf32>
    %149 = arith.addf %147, %148 : vector<16x32xf32>
    %150 = arith.addf %137, %149 : vector<16x32xf32>
    %cst_62 = arith.constant dense<0.000000e+00> : vector<16xf32>
    %151 = vector.multi_reduction <add>, %150, %cst_62 [1] : vector<16x32xf32> to vector<16xf32>
    %152 = vector.shape_cast %151 : vector<16xf32> to vector<16x1xf32>
    %cst_63 = arith.constant 3.200000e+01 : f32
    %153 = vector.broadcast %cst_63 : f32 to vector<16x1xf32>
    %154 = arith.divf %152, %153 : vector<16x1xf32>
    %155 = vector.broadcast %154 : vector<16x1xf32> to vector<16x32xf32>
    %156 = arith.subf %150, %155 : vector<16x32xf32>
    %157 = arith.mulf %156, %156 : vector<16x32xf32>
    %cst_64 = arith.constant dense<0.000000e+00> : vector<16xf32>
    %158 = vector.multi_reduction <add>, %157, %cst_64 [1] : vector<16x32xf32> to vector<16xf32>
    %159 = vector.shape_cast %158 : vector<16xf32> to vector<16x1xf32>
    %cst_65 = arith.constant 3.200000e+01 : f32
    %160 = vector.broadcast %cst_65 : f32 to vector<16x1xf32>
    %161 = arith.divf %159, %160 : vector<16x1xf32>
    %cst_66 = arith.constant 9.99999974E-6 : f32
    %162 = vector.broadcast %cst_66 : f32 to vector<16x1xf32>
    %163 = arith.addf %161, %162 : vector<16x1xf32>
    %164 = math.rsqrt %163 : vector<16x1xf32>
    %165 = vector.broadcast %164 : vector<16x1xf32> to vector<16x32xf32>
    %166 = arith.mulf %156, %165 : vector<16x32xf32>
    %167 = vector.broadcast %13 : vector<1x32xf32> to vector<16x32xf32>
    %168 = arith.mulf %166, %167 : vector<16x32xf32>
    %169 = vector.broadcast %15 : vector<1x32xf32> to vector<16x32xf32>
    %170 = arith.addf %168, %169 : vector<16x32xf32>
    %c0_67 = arith.constant 0 : index
    %c0_68 = arith.constant 0 : index
    %171 = vector.load %arg8[%c0_67, %c0_68] : memref<16x32xf32, #tpu.memory_space<vmem>>, vector<16x32xf32>
    tpu.vector_store %arg8[%c0_67, %c0_68], %170 {strides = array<i32>} : memref<16x32xf32, #tpu.memory_space<vmem>>, vector<16x32xf32>,
    return
  }
  func.func @transform_0(%arg0: i32) -> (i32, i32) {
    %c0_i32 = arith.constant 0 : i32
    %c0_i32_0 = arith.constant 0 : i32
    %c0_i32_1 = arith.constant 0 : i32
    return %c0_i32, %c0_i32_0 : i32, i32
  }
  func.func @transform_1(%arg0: i32) -> (i32, i32) {
    %c0_i32 = arith.constant 0 : i32
    %c0_i32_0 = arith.constant 0 : i32
    %c0_i32_1 = arith.constant 0 : i32
    return %c0_i32, %c0_i32_0 : i32, i32
  }
  func.func @transform_2(%arg0: i32) -> (i32, i32, i32) {
    %c0_i32 = arith.constant 0 : i32
    %c0_i32_0 = arith.constant 0 : i32
    %c0_i32_1 = arith.constant 0 : i32
    return %arg0, %c0_i32, %c0_i32_0 : i32, i32, i32
  }
  func.func @transform_3(%arg0: i32) -> (i32, i32, i32) {
    %c0_i32 = arith.constant 0 : i32
    %c0_i32_0 = arith.constant 0 : i32
    %c0_i32_1 = arith.constant 0 : i32
    return %arg0, %c0_i32, %c0_i32_0 : i32, i32, i32
  }
  func.func @transform_4(%arg0: i32) -> (i32, i32, i32) {
    %c0_i32 = arith.constant 0 : i32
    %c0_i32_0 = arith.constant 0 : i32
    %c0_i32_1 = arith.constant 0 : i32
    return %arg0, %c0_i32, %c0_i32_0 : i32, i32, i32
  }
  func.func @transform_5(%arg0: i32) -> (i32, i32, i32) {
    %c0_i32 = arith.constant 0 : i32
    %c0_i32_0 = arith.constant 0 : i32
    %c0_i32_1 = arith.constant 0 : i32
    return %arg0, %c0_i32, %c0_i32_0 : i32, i32, i32
  }
  func.func @transform_6(%arg0: i32) -> (i32, i32, i32) {
    %c0_i32 = arith.constant 0 : i32
    %c0_i32_0 = arith.constant 0 : i32
    %c0_i32_1 = arith.constant 0 : i32
    return %arg0, %c0_i32, %c0_i32_0 : i32, i32, i32
  }
  func.func @transform_7(%arg0: i32) -> (i32, i32) {
    %c0_i32 = arith.constant 0 : i32
    %c0_i32_0 = arith.constant 0 : i32
    %c0_i32_1 = arith.constant 0 : i32
    return %c0_i32, %c0_i32_0 : i32, i32
  }
}

</mosaic_0001>

<llo_original>
// kernel: tpu_custom_call.1
$region0: #{tpu_custom_call.1}
  #allocation0 [shape = 'u32[]', space=smem, size = 0x4, offset = 0x4, fixed_abs, tag = 'smem constant byte address 0x4 - core index']
  #allocation1 [shape = 'u32[144,128]{1,0:T(1,128)}', space=vmem, size = 0x12000, scoped, tag = 'internal scratch']
  %s0 = inlined_call_operand.vmem [shape: f32[16,32], index: 0, kind: input, shape index: {}]
  %s1 = inlined_call_operand.vmem [shape: f32[8,8], index: 1, kind: input, shape index: {}]
  %s2 = inlined_call_operand.vmem [shape: f32[1,32,96], index: 2, kind: input, shape index: {}]
  %s3 = inlined_call_operand.vmem [shape: f32[1,32,32], index: 3, kind: input, shape index: {}]
  %s4 = inlined_call_operand.vmem [shape: f32[1,32,128], index: 4, kind: input, shape index: {}]
  %s5 = inlined_call_operand.vmem [shape: f32[1,128,32], index: 5, kind: input, shape index: {}]
  %s6 = inlined_call_operand.vmem [shape: f32[1,8,128], index: 6, kind: input, shape index: {}]
  %s7 = inlined_call_operand.hbm [shape: f32[16,32], index: 7, kind: output, shape index: {}]
  %s8 = sld [smem:[#allocation0]]
  $region42: #{tpu_custom_call.1} parent=0
    _
  %s10 = ssub.s32 1, %s8
  %s11 = scalar_select 0, %s10, %s8
  $region1: #{tpu_custom_call.1} parent=0
    #allocation2 [shape = 'u8[8192]{0}', space=vmem, size = 0x2000, scoped, tag = 'output window, operand 0, single buffered']
    #allocation3 [shape = 's32[1]{0}', space=sflag, size = 0x4, scoped, tag = 'scoped memory for tpu_custom_call.1']
    %12 = vsyncpa [#allocation3], 0
    // Predicated region
    $region2: #{tpu_custom_call.1} parent=1 // pred_check
      _
    $region3: #{tpu_custom_call.1} parent=1 // pred_check_branch
      %14 = sbr.rel (0) target = $region5
    $region4: #{tpu_custom_call.1} parent=1 // pred_region
      _
    $region5: #{tpu_custom_call.1} parent=1 // pred_fallthru
      _
    // Predicated region
    $region6: #{tpu_custom_call.1} parent=1 // pred_check
      _
    $region7: #{tpu_custom_call.1} parent=1 // pred_check_branch
      %16 = sbr.rel (0) target = $region9
    $region8: #{tpu_custom_call.1} parent=1 // pred_region
      _
    $region9: #{tpu_custom_call.1} parent=1 // pred_fallthru
      _
    // Predicated region
    $region10: #{tpu_custom_call.1} parent=1 // pred_check
      _
    $region11: #{tpu_custom_call.1} parent=1 // pred_check_branch
      %18 = sbr.rel (0) target = $region13
    $region12: #{tpu_custom_call.1} parent=1 // pred_region
      _
    $region13: #{tpu_custom_call.1} parent=1 // pred_fallthru
      _
    // Predicated region
    $region14: #{tpu_custom_call.1} parent=1 // pred_check
      _
    $region15: #{tpu_custom_call.1} parent=1 // pred_check_branch
      %20 = sbr.rel (0) target = $region17
    $region16: #{tpu_custom_call.1} parent=1 // pred_region
      _
    $region17: #{tpu_custom_call.1} parent=1 // pred_fallthru
      _
    // Predicated region
    $region18: #{tpu_custom_call.1} parent=1 // pred_check
      _
    $region19: #{tpu_custom_call.1} parent=1 // pred_check_branch
      %22 = sbr.rel (0) target = $region21
    $region20: #{tpu_custom_call.1} parent=1 // pred_region
      _
    $region21: #{tpu_custom_call.1} parent=1 // pred_fallthru
      _
    // Predicated region
    $region22: #{tpu_custom_call.1} parent=1 // pred_check
      _
    $region23: #{tpu_custom_call.1} parent=1 // pred_check_branch
      %24 = sbr.rel (0) target = $region25
    $region24: #{tpu_custom_call.1} parent=1 // pred_region
      _
    $region25: #{tpu_custom_call.1} parent=1 // pred_fallthru
      _
    // Predicated region
    $region26: #{tpu_custom_call.1} parent=1 // pred_check
      _
    $region27: #{tpu_custom_call.1} parent=1 // pred_check_branch
      %26 = sbr.rel (0) target = $region29
    $region28: #{tpu_custom_call.1} parent=1 // pred_region
      _
    $region29: #{tpu_custom_call.1} parent=1 // pred_fallthru
      _
    %p27 = scmp.eq.s32.totalorder 0, 0
    // Predicated region
    $region30: #{tpu_custom_call.1} parent=1 // pred_check
      %p28 = pneg %p27
    $region31: #{tpu_custom_call.1} parent=1 // pred_check_branch
      %30 = sbr.rel (%p28) target = $region33
    $region32: #{tpu_custom_call.1} parent=1 // pred_region
      %v31 = vld [vmem:[%s0] sm:$0xff]
      %v32 = vld [vmem:[%s0 + $0x8] sm:$0xff]
      %vm33 = vcmask 261120
      %34 = vst.msk [vmem:[#allocation2] sm:$0xff] %vm33, %v31
      %35 = vst.msk [vmem:[#allocation2 + $0x8] sm:$0xff] %vm33, %v32
    $region33: #{tpu_custom_call.1} parent=1 // pred_fallthru
      _
    %v36 = vld [vmem:[#allocation2] sm:$0xff]
    %v37 = vld [vmem:[#allocation2 + $0x8] sm:$0xff]
    %v38 = vld [vmem:[%s6] sm:$0x1]
    %v39 = vld [vmem:[%s6 + $0x1] sm:$0x1]
    %v40 = vld [vmem:[%s6 + $0x2] sm:$0x1]
    %v41 = vld [vmem:[%s6 + $0x3] sm:$0x1]
    %v42 = vld [vmem:[%s6 + $0x4] sm:$0x1]
    %v43 = vld [vmem:[%s6 + $0x5] sm:$0x1]
    %v44 = vld [vmem:[%s6 + $0x6] sm:$0x1]
    %v45 = vld [vmem:[%s6 + $0x7] sm:$0x1]
    %v46 = vld [vmem:[%s2] sm:$0xff]
    %v47 = vld [vmem:[%s2 + $0x8] sm:$0xff]
    %v48 = vld [vmem:[%s2 + $0x10] sm:$0xff]
    %v49 = vld [vmem:[%s2 + $0x18] sm:$0xff]
    %v50 = vlaneseq
    %v51 = vshrl.u32 %v50, 7
    %v52 = vsub.s32 0, %v51
    %v53 = vrot.slane %v38, %v52
    %vm54 = vcmask 261120
    %v56 = vsel %vm54, %v36, 0
    %v59 = vsel %vm54, %v37, 0
    %61 = vmatprep.subr.mxu0 0.0
    %62 = vmatpush1.msra.mxu0 %v46
    %63 = vmatprep.subr.mxu0 0.0
    %64 = vmatpush1.msra.mxu0 %v47
    %65 = vmatprep.subr.mxu0 0.0
    %66 = vmatpush1.msra.mxu0 %v48
    %67 = vmatprep.subr.mxu0 0.0
    %68 = vmatpush1.msra.mxu0 %v49
    %69 = vmatprep.subr.mxu0 0.0
    %70 = vmatpush1.msra.mxu0 0.0
    %71 = vmatprep.subr.mxu0 0.0
    %72 = vmatpush1.msra.mxu0 0.0
    %73 = vmatprep.subr.mxu0 0.0
    %74 = vmatpush1.msra.mxu0 0.0
    %75 = vmatprep.subr.mxu0 0.0
    %76 = vmatpush1.msra.mxu0 0.0
    %77 = vmatprep.subr.mxu0 0.0
    %78 = vmatpush1.msra.mxu0 0.0
    %79 = vmatprep.subr.mxu0 0.0
    %80 = vmatpush1.msra.mxu0 0.0
    %81 = vmatprep.subr.mxu0 0.0
    %82 = vmatpush1.msra.mxu0 0.0
    %83 = vmatprep.subr.mxu0 0.0
    %84 = vmatpush1.msra.mxu0 0.0
    %85 = vmatprep.subr.mxu0 0.0
    %86 = vmatpush1.msra.mxu0 0.0
    %87 = vmatprep.subr.mxu0 0.0
    %88 = vmatpush1.msra.mxu0 0.0
    %89 = vmatprep.subr.mxu0 0.0
    %90 = vmatpush1.msra.mxu0 0.0
    %91 = vmatprep.subr.mxu0 0.0
    %92 = vmatpush1.msra.mxu0 0.0
    %93 = vmatprep.subr.mxu0 0.0
    %94 = vmatpush1.msra.mxu0 0.0
    %95 = vmatprep.subr.mxu0 0.0
    %96 = vmatpush1.msra.mxu0 0.0
    %97 = vmatprep.subr.mxu0 0.0
    %98 = vmatpush1.msra.mxu0 0.0
    %99 = vmatprep.subr.mxu0 0.0
    %100 = vmatpush1.msra.mxu0 0.0
    %101 = vmatprep.subr.mxu0 0.0
    %102 = vmatpush1.msra.mxu0 0.0
    %103 = vmatprep.subr.mxu0 0.0
    %104 = vmatpush1.msra.mxu0 0.0
    %105 = vmatprep.subr.mxu0 0.0
    %106 = vmatpush1.msra.mxu0 0.0
    %107 = vmatprep.subr.mxu0 0.0
    %108 = vmatpush1.msra.mxu0 0.0
    %109 = vmatprep.subr.mxu0 0.0
    %110 = vmatpush1.msra.mxu0 0.0
    %111 = vmatprep.subr.mxu0 0.0
    %112 = vmatpush1.msra.mxu0 0.0
    %113 = vmatprep.subr.mxu0 0.0
    %114 = vmatpush1.msra.mxu0 0.0
    %115 = vmatprep.subr.mxu0 0.0
    %116 = vmatpush1.msra.mxu0 0.0
    %117 = vmatprep.subr.mxu0 0.0
    %118 = vmatpush1.msra.mxu0 0.0
    %119 = vmatprep.subr.mxu0 0.0
    %120 = vmatpush1.msra.mxu0 0.0
    %121 = vmatprep.subr.mxu0 0.0
    %122 = vmatpush1.msra.mxu0 0.0
    %123 = vmatprep.subr.mxu0 0.0
    %124 = vmatpush1.msra.mxu0 0.0
    %125 = vmatprep.mubr.f32.mxu0 0.0
    %126 = vmatmul.mubr.f32.gmra.mrb[0].mxu0 %v56
    %v127 = vpop.f32.mrb[0].mxu0
    %v128 = vadd.f32 %v53, %v127
    %v129 = vpop.f32.mrb[0].mxu0
    %130 = vmatprep.mubr.f32.mxu0 0.0
    %131 = vmatmul.mubr.f32.gmra.mrb[0].mxu0 %v59
    %v132 = vpop.f32.mrb[0].mxu0
    %v133 = vadd.f32 %v53, %v132
    %v134 = vpop.f32.mrb[0].mxu0
    %135 = vdwg.mxu0
    %v136 = vld [vmem:[%s1] sm:$0xff]
    %v137 = vld [vmem:[%s3] sm:$0xff]
    %v138 = vld [vmem:[%s3 + $0x8] sm:$0xff]
    %v139 = vld [vmem:[%s3 + $0x10] sm:$0xff]
    %v140 = vld [vmem:[%s3 + $0x18] sm:$0xff]
    %142 = vrot.lane.b32.xlu0 %v128, 96
    %v143 = vpop.permute.xlu0 %142
    %vm144 = vcmask 64512
    %v145 = vsel %vm144, %v128, 0
    %v147 = vsel %vm144, %v143, 0
    %149 = vmatprep.subr.mxu0 0.0
    %150 = vmatpush1.xpose.msra.mxu0 %v147
    %151 = vmatprep.subr.mxu0 0.0
    %152 = vmatpush1.xpose.msra.mxu0 0.0
    %153 = vmatprep.subr.mxu0 0.0
    %154 = vmatpush1.xpose.msra.mxu0 0.0
    %155 = vmatprep.subr.mxu0 0.0
    %156 = vmatpush1.xpose.msra.mxu0 0.0
    %157 = vmatprep.subr.mxu0 0.0
    %158 = vmatpush1.xpose.msra.mxu0 0.0
    %159 = vmatprep.subr.mxu0 0.0
    %160 = vmatpush1.xpose.msra.mxu0 0.0
    %161 = vmatprep.subr.mxu0 0.0
    %162 = vmatpush1.xpose.msra.mxu0 0.0
    %163 = vmatprep.subr.mxu0 0.0
    %164 = vmatpush1.xpose.msra.mxu0 0.0
    %165 = vmatprep.subr.mxu0 0.0
    %166 = vmatpush1.xpose.msra.mxu0 0.0
    %167 = vmatprep.subr.mxu0 0.0
    %168 = vmatpush1.xpose.msra.mxu0 0.0
    %169 = vmatprep.subr.mxu0 0.0
    %170 = vmatpush1.xpose.msra.mxu0 0.0
    %171 = vmatprep.subr.mxu0 0.0
    %172 = vmatpush1.xpose.msra.mxu0 0.0
    %173 = vmatprep.subr.mxu0 0.0
    %174 = vmatpush1.xpose.msra.mxu0 0.0
    %175 = vmatprep.subr.mxu0 0.0
    %176 = vmatpush1.xpose.msra.mxu0 0.0
    %177 = vmatprep.subr.mxu0 0.0
    %178 = vmatpush1.xpose.msra.mxu0 0.0
    %179 = vmatprep.subr.mxu0 0.0
    %180 = vmatpush1.xpose.msra.mxu0 0.0
    %181 = vmatprep.subr.mxu0 0.0
    %182 = vmatpush1.xpose.msra.mxu0 0.0
    %183 = vmatprep.subr.mxu0 0.0
    %184 = vmatpush1.xpose.msra.mxu0 0.0
    %185 = vmatprep.subr.mxu0 0.0
    %186 = vmatpush1.xpose.msra.mxu0 0.0
    %187 = vmatprep.subr.mxu0 0.0
    %188 = vmatpush1.xpose.msra.mxu0 0.0
    %189 = vmatprep.subr.mxu0 0.0
    %190 = vmatpush1.xpose.msra.mxu0 0.0
    %191 = vmatprep.subr.mxu0 0.0
    %192 = vmatpush1.xpose.msra.mxu0 0.0
    %193 = vmatprep.subr.mxu0 0.0
    %194 = vmatpush1.xpose.msra.mxu0 0.0
    %195 = vmatprep.subr.mxu0 0.0
    %196 = vmatpush1.xpose.msra.mxu0 0.0
    %197 = vmatprep.subr.mxu0 0.0
    %198 = vmatpush1.xpose.msra.mxu0 0.0
    %199 = vmatprep.subr.mxu0 0.0
    %200 = vmatpush1.xpose.msra.mxu0 0.0
    %201 = vmatprep.subr.mxu0 0.0
    %202 = vmatpush1.xpose.msra.mxu0 0.0
    %203 = vmatprep.subr.mxu0 0.0
    %204 = vmatpush1.xpose.msra.mxu0 0.0
    %205 = vmatprep.subr.mxu0 0.0
    %206 = vmatpush1.xpose.msra.mxu0 0.0
    %207 = vmatprep.subr.mxu0 0.0
    %208 = vmatpush1.xpose.msra.mxu0 0.0
    %209 = vmatprep.subr.mxu0 0.0
    %210 = vmatpush1.xpose.msra.mxu0 0.0
    %211 = vmatprep.subr.mxu0 0.0
    %212 = vmatpush1.xpose.msra.mxu0 0.0
    %213 = vmatprep.mubr.f32.mxu0 0.0
    %214 = vmatmul.mubr.f32.gmra.mrb[0].mxu0 %v145
    %v215 = vpop.f32.mrb[0].mxu0
    %v216 = vadd.f32 %v136, %v215
    %v217 = vpop.f32.mrb[0].mxu0
    %218 = vdwg.mxu0
    %220 = vrot.lane.b32.xlu0 %v133, 96
    %v221 = vpop.permute.xlu0 %220
    %v222 = vsel %vm144, %v133, 0
    %v224 = vsel %vm144, %v221, 0
    %226 = vmatprep.subr.mxu0 0.0
    %227 = vmatpush1.xpose.msra.mxu0 %v224
    %228 = vmatprep.subr.mxu0 0.0
    %229 = vmatpush1.xpose.msra.mxu0 0.0
    %230 = vmatprep.subr.mxu0 0.0
    %231 = vmatpush1.xpose.msra.mxu0 0.0
    %232 = vmatprep.subr.mxu0 0.0
    %233 = vmatpush1.xpose.msra.mxu0 0.0
    %234 = vmatprep.subr.mxu0 0.0
    %235 = vmatpush1.xpose.msra.mxu0 0.0
    %236 = vmatprep.subr.mxu0 0.0
    %237 = vmatpush1.xpose.msra.mxu0 0.0
    %238 = vmatprep.subr.mxu0 0.0
    %239 = vmatpush1.xpose.msra.mxu0 0.0
    %240 = vmatprep.subr.mxu0 0.0
    %241 = vmatpush1.xpose.msra.mxu0 0.0
    %242 = vmatprep.subr.mxu0 0.0
    %243 = vmatpush1.xpose.msra.mxu0 0.0
    %244 = vmatprep.subr.mxu0 0.0
    %245 = vmatpush1.xpose.msra.mxu0 0.0
    %246 = vmatprep.subr.mxu0 0.0
    %247 = vmatpush1.xpose.msra.mxu0 0.0
    %248 = vmatprep.subr.mxu0 0.0
    %249 = vmatpush1.xpose.msra.mxu0 0.0
    %250 = vmatprep.subr.mxu0 0.0
    %251 = vmatpush1.xpose.msra.mxu0 0.0
    %252 = vmatprep.subr.mxu0 0.0
    %253 = vmatpush1.xpose.msra.mxu0 0.0
    %254 = vmatprep.subr.mxu0 0.0
    %255 = vmatpush1.xpose.msra.mxu0 0.0
    %256 = vmatprep.subr.mxu0 0.0
    %257 = vmatpush1.xpose.msra.mxu0 0.0
    %258 = vmatprep.subr.mxu0 0.0
    %259 = vmatpush1.xpose.msra.mxu0 0.0
    %260 = vmatprep.subr.mxu0 0.0
    %261 = vmatpush1.xpose.msra.mxu0 0.0
    %262 = vmatprep.subr.mxu0 0.0
    %263 = vmatpush1.xpose.msra.mxu0 0.0
    %264 = vmatprep.subr.mxu0 0.0
    %265 = vmatpush1.xpose.msra.mxu0 0.0
    %266 = vmatprep.subr.mxu0 0.0
    %267 = vmatpush1.xpose.msra.mxu0 0.0
    %268 = vmatprep.subr.mxu0 0.0
    %269 = vmatpush1.xpose.msra.mxu0 0.0
    %270 = vmatprep.subr.mxu0 0.0
    %271 = vmatpush1.xpose.msra.mxu0 0.0
    %272 = vmatprep.subr.mxu0 0.0
    %273 = vmatpush1.xpose.msra.mxu0 0.0
    %274 = vmatprep.subr.mxu0 0.0
    %275 = vmatpush1.xpose.msra.mxu0 0.0
    %276 = vmatprep.subr.mxu0 0.0
    %277 = vmatpush1.xpose.msra.mxu0 0.0
    %278 = vmatprep.subr.mxu0 0.0
    %279 = vmatpush1.xpose.msra.mxu0 0.0
    %280 = vmatprep.subr.mxu0 0.0
    %281 = vmatpush1.xpose.msra.mxu0 0.0
    %282 = vmatprep.subr.mxu0 0.0
    %283 = vmatpush1.xpose.msra.mxu0 0.0
    %284 = vmatprep.subr.mxu0 0.0
    %285 = vmatpush1.xpose.msra.mxu0 0.0
    %286 = vmatprep.subr.mxu0 0.0
    %287 = vmatpush1.xpose.msra.mxu0 0.0
    %288 = vmatprep.subr.mxu0 0.0
    %289 = vmatpush1.xpose.msra.mxu0 0.0
    %290 = vmatprep.mubr.f32.mxu0 0.0
    %291 = vmatmul.mubr.f32.gmra.mrb[0].mxu0 %v222
    %v292 = vpop.f32.mrb[0].mxu0
    %v293 = vadd.f32 %v136, %v292
    %v294 = vpop.f32.mrb[0].mxu0
    %295 = vdwg.mxu0
    %v296 = vsel %vm144, %v216, -inf
    %297 = vmax.xlane.f32.xlu0 %v296
    %v298 = vpop.xlane.xlu0 %297
    %v299 = vsel %vm144, %v293, -inf
    %300 = vmax.xlane.f32.xlu0 %v299
    %v301 = vpop.xlane.xlu0 %300
    %v302 = vsub.f32 %v216, %v298
    %v303 = vsub.f32 %v293, %v301
    %v304 = vmul.f32 %v302, 1.442695
    %v305 = vpow.pop %v304
    %v306 = vmul.f32 %v303, 1.442695
    %v307 = vpow.pop %v306
    %v308 = vsel %vm144, %v305, 0.0
    %309 = vadd.xlane.f32.xlu0 %v308
    %v310 = vpop.xlane.xlu0 %309
    %v311 = vsel %vm144, %v307, 0.0
    %312 = vadd.xlane.f32.xlu0 %v311
    %v313 = vpop.xlane.xlu0 %312
    %v314 = vrcp.pop %v310
    %v315 = vrcp.pop %v313
    %v316 = vmul.f32 %v305, %v314
    %v317 = vmul.f32 %v307, %v315
    %318 = vrot.lane.b32.xlu0 %v128, 64
    %v319 = vpop.permute.xlu0 %318
    %v322 = vsel %vm144, %v316, 0
    %324 = vmatprep.subr.mxu0 0.0
    %325 = vmatpush1.msra.mxu0 %v319
    %326 = vmatprep.subr.mxu0 0.0
    %327 = vmatpush1.msra.mxu0 0.0
    %328 = vmatprep.subr.mxu0 0.0
    %329 = vmatpush1.msra.mxu0 0.0
    %330 = vmatprep.subr.mxu0 0.0
    %331 = vmatpush1.msra.mxu0 0.0
    %332 = vmatprep.subr.mxu0 0.0
    %333 = vmatpush1.msra.mxu0 0.0
    %334 = vmatprep.subr.mxu0 0.0
    %335 = vmatpush1.msra.mxu0 0.0
    %336 = vmatprep.subr.mxu0 0.0
    %337 = vmatpush1.msra.mxu0 0.0
    %338 = vmatprep.subr.mxu0 0.0
    %339 = vmatpush1.msra.mxu0 0.0
    %340 = vmatprep.subr.mxu0 0.0
    %341 = vmatpush1.msra.mxu0 0.0
    %342 = vmatprep.subr.mxu0 0.0
    %343 = vmatpush1.msra.mxu0 0.0
    %344 = vmatprep.subr.mxu0 0.0
    %345 = vmatpush1.msra.mxu0 0.0
    %346 = vmatprep.subr.mxu0 0.0
    %347 = vmatpush1.msra.mxu0 0.0
    %348 = vmatprep.subr.mxu0 0.0
    %349 = vmatpush1.msra.mxu0 0.0
    %350 = vmatprep.subr.mxu0 0.0
    %351 = vmatpush1.msra.mxu0 0.0
    %352 = vmatprep.subr.mxu0 0.0
    %353 = vmatpush1.msra.mxu0 0.0
    %354 = vmatprep.subr.mxu0 0.0
    %355 = vmatpush1.msra.mxu0 0.0
    %356 = vmatprep.subr.mxu0 0.0
    %357 = vmatpush1.msra.mxu0 0.0
    %358 = vmatprep.subr.mxu0 0.0
    %359 = vmatpush1.msra.mxu0 0.0
    %360 = vmatprep.subr.mxu0 0.0
    %361 = vmatpush1.msra.mxu0 0.0
    %362 = vmatprep.subr.mxu0 0.0
    %363 = vmatpush1.msra.mxu0 0.0
    %364 = vmatprep.subr.mxu0 0.0
    %365 = vmatpush1.msra.mxu0 0.0
    %366 = vmatprep.subr.mxu0 0.0
    %367 = vmatpush1.msra.mxu0 0.0
    %368 = vmatprep.subr.mxu0 0.0
    %369 = vmatpush1.msra.mxu0 0.0
    %370 = vmatprep.subr.mxu0 0.0
    %371 = vmatpush1.msra.mxu0 0.0
    %372 = vmatprep.subr.mxu0 0.0
    %373 = vmatpush1.msra.mxu0 0.0
    %374 = vmatprep.subr.mxu0 0.0
    %375 = vmatpush1.msra.mxu0 0.0
    %376 = vmatprep.subr.mxu0 0.0
    %377 = vmatpush1.msra.mxu0 0.0
    %378 = vmatprep.subr.mxu0 0.0
    %379 = vmatpush1.msra.mxu0 0.0
    %380 = vmatprep.subr.mxu0 0.0
    %381 = vmatpush1.msra.mxu0 0.0
    %382 = vmatprep.subr.mxu0 0.0
    %383 = vmatpush1.msra.mxu0 0.0
    %384 = vmatprep.subr.mxu0 0.0
    %385 = vmatpush1.msra.mxu0 0.0
    %386 = vmatprep.subr.mxu0 0.0
    %387 = vmatpush1.msra.mxu0 0.0
    %388 = vmatprep.mubr.f32.mxu0 0.0
    %389 = vmatmul.mubr.f32.gmra.mrb[0].mxu0 %v322
    %v390 = vpop.f32.mrb[0].mxu0
    %v391 = vadd.f32 0.0, %v390
    %v392 = vpop.f32.mrb[0].mxu0
    %393 = vdwg.mxu0
    %394 = vrot.lane.b32.xlu0 %v133, 64
    %v395 = vpop.permute.xlu0 %394
    %v398 = vsel %vm144, %v317, 0
    %400 = vmatprep.subr.mxu0 0.0
    %401 = vmatpush1.msra.mxu0 %v395
    %402 = vmatprep.subr.mxu0 0.0
    %403 = vmatpush1.msra.mxu0 0.0
    %404 = vmatprep.subr.mxu0 0.0
    %405 = vmatpush1.msra.mxu0 0.0
    %406 = vmatprep.subr.mxu0 0.0
    %407 = vmatpush1.msra.mxu0 0.0
    %408 = vmatprep.subr.mxu0 0.0
    %409 = vmatpush1.msra.mxu0 0.0
    %410 = vmatprep.subr.mxu0 0.0
    %411 = vmatpush1.msra.mxu0 0.0
    %412 = vmatprep.subr.mxu0 0.0
    %413 = vmatpush1.msra.mxu0 0.0
    %414 = vmatprep.subr.mxu0 0.0
    %415 = vmatpush1.msra.mxu0 0.0
    %416 = vmatprep.subr.mxu0 0.0
    %417 = vmatpush1.msra.mxu0 0.0
    %418 = vmatprep.subr.mxu0 0.0
    %419 = vmatpush1.msra.mxu0 0.0
    %420 = vmatprep.subr.mxu0 0.0
    %421 = vmatpush1.msra.mxu0 0.0
    %422 = vmatprep.subr.mxu0 0.0
    %423 = vmatpush1.msra.mxu0 0.0
    %424 = vmatprep.subr.mxu0 0.0
    %425 = vmatpush1.msra.mxu0 0.0
    %426 = vmatprep.subr.mxu0 0.0
    %427 = vmatpush1.msra.mxu0 0.0
    %428 = vmatprep.subr.mxu0 0.0
    %429 = vmatpush1.msra.mxu0 0.0
    %430 = vmatprep.subr.mxu0 0.0
    %431 = vmatpush1.msra.mxu0 0.0
    %432 = vmatprep.subr.mxu0 0.0
    %433 = vmatpush1.msra.mxu0 0.0
    %434 = vmatprep.subr.mxu0 0.0
    %435 = vmatpush1.msra.mxu0 0.0
    %436 = vmatprep.subr.mxu0 0.0
    %437 = vmatpush1.msra.mxu0 0.0
    %438 = vmatprep.subr.mxu0 0.0
    %439 = vmatpush1.msra.mxu0 0.0
    %440 = vmatprep.subr.mxu0 0.0
    %441 = vmatpush1.msra.mxu0 0.0
    %442 = vmatprep.subr.mxu0 0.0
    %443 = vmatpush1.msra.mxu0 0.0
    %444 = vmatprep.subr.mxu0 0.0
    %445 = vmatpush1.msra.mxu0 0.0
    %446 = vmatprep.subr.mxu0 0.0
    %447 = vmatpush1.msra.mxu0 0.0
    %448 = vmatprep.subr.mxu0 0.0
    %449 = vmatpush1.msra.mxu0 0.0
    %450 = vmatprep.subr.mxu0 0.0
    %451 = vmatpush1.msra.mxu0 0.0
    %452 = vmatprep.subr.mxu0 0.0
    %453 = vmatpush1.msra.mxu0 0.0
    %454 = vmatprep.subr.mxu0 0.0
    %455 = vmatpush1.msra.mxu0 0.0
    %456 = vmatprep.subr.mxu0 0.0
    %457 = vmatpush1.msra.mxu0 0.0
    %458 = vmatprep.subr.mxu0 0.0
    %459 = vmatpush1.msra.mxu0 0.0
    %460 = vmatprep.subr.mxu0 0.0
    %461 = vmatpush1.msra.mxu0 0.0
    %462 = vmatprep.subr.mxu0 0.0
    %463 = vmatpush1.msra.mxu0 0.0
    %464 = vmatprep.mubr.f32.mxu0 0.0
    %465 = vmatmul.mubr.f32.gmra.mrb[0].mxu0 %v398
    %v466 = vpop.f32.mrb[0].mxu0
    %v467 = vadd.f32 0.0, %v466
    %v468 = vpop.f32.mrb[0].mxu0
    %469 = vdwg.mxu0
    %470 = vrot.lane.b32.xlu0 %v128, 120
    %v471 = vpop.permute.xlu0 %470
    %472 = vrot.lane.b32.xlu0 %v128, 88
    %v473 = vpop.permute.xlu0 %472
    %v474 = vsel %vm144, %v471, 0
    %v476 = vsel %vm144, %v473, 0
    %478 = vmatprep.subr.mxu0 0.0
    %479 = vmatpush1.xpose.msra.mxu0 %v476
    %480 = vmatprep.subr.mxu0 0.0
    %481 = vmatpush1.xpose.msra.mxu0 0.0
    %482 = vmatprep.subr.mxu0 0.0
    %483 = vmatpush1.xpose.msra.mxu0 0.0
    %484 = vmatprep.subr.mxu0 0.0
    %485 = vmatpush1.xpose.msra.mxu0 0.0
    %486 = vmatprep.subr.mxu0 0.0
    %487 = vmatpush1.xpose.msra.mxu0 0.0
    %488 = vmatprep.subr.mxu0 0.0
    %489 = vmatpush1.xpose.msra.mxu0 0.0
    %490 = vmatprep.subr.mxu0 0.0
    %491 = vmatpush1.xpose.msra.mxu0 0.0
    %492 = vmatprep.subr.mxu0 0.0
    %493 = vmatpush1.xpose.msra.mxu0 0.0
    %494 = vmatprep.subr.mxu0 0.0
    %495 = vmatpush1.xpose.msra.mxu0 0.0
    %496 = vmatprep.subr.mxu0 0.0
    %497 = vmatpush1.xpose.msra.mxu0 0.0
    %498 = vmatprep.subr.mxu0 0.0
    %499 = vmatpush1.xpose.msra.mxu0 0.0
    %500 = vmatprep.subr.mxu0 0.0
    %501 = vmatpush1.xpose.msra.mxu0 0.0
    %502 = vmatprep.subr.mxu0 0.0
    %503 = vmatpush1.xpose.msra.mxu0 0.0
    %504 = vmatprep.subr.mxu0 0.0
    %505 = vmatpush1.xpose.msra.mxu0 0.0
    %506 = vmatprep.subr.mxu0 0.0
    %507 = vmatpush1.xpose.msra.mxu0 0.0
    %508 = vmatprep.subr.mxu0 0.0
    %509 = vmatpush1.xpose.msra.mxu0 0.0
    %510 = vmatprep.subr.mxu0 0.0
    %511 = vmatpush1.xpose.msra.mxu0 0.0
    %512 = vmatprep.subr.mxu0 0.0
    %513 = vmatpush1.xpose.msra.mxu0 0.0
    %514 = vmatprep.subr.mxu0 0.0
    %515 = vmatpush1.xpose.msra.mxu0 0.0
    %516 = vmatprep.subr.mxu0 0.0
    %517 = vmatpush1.xpose.msra.mxu0 0.0
    %518 = vmatprep.subr.mxu0 0.0
    %519 = vmatpush1.xpose.msra.mxu0 0.0
    %520 = vmatprep.subr.mxu0 0.0
    %521 = vmatpush1.xpose.msra.mxu0 0.0
    %522 = vmatprep.subr.mxu0 0.0
    %523 = vmatpush1.xpose.msra.mxu0 0.0
    %524 = vmatprep.subr.mxu0 0.0
    %525 = vmatpush1.xpose.msra.mxu0 0.0
    %526 = vmatprep.subr.mxu0 0.0
    %527 = vmatpush1.xpose.msra.mxu0 0.0
    %528 = vmatprep.subr.mxu0 0.0
    %529 = vmatpush1.xpose.msra.mxu0 0.0
    %530 = vmatprep.subr.mxu0 0.0
    %531 = vmatpush1.xpose.msra.mxu0 0.0
    %532 = vmatprep.subr.mxu0 0.0
    %533 = vmatpush1.xpose.msra.mxu0 0.0
    %534 = vmatprep.subr.mxu0 0.0
    %535 = vmatpush1.xpose.msra.mxu0 0.0
    %536 = vmatprep.subr.mxu0 0.0
    %537 = vmatpush1.xpose.msra.mxu0 0.0
    %538 = vmatprep.subr.mxu0 0.0
    %539 = vmatpush1.xpose.msra.mxu0 0.0
    %540 = vmatprep.subr.mxu0 0.0
    %541 = vmatpush1.xpose.msra.mxu0 0.0
    %542 = vmatprep.mubr.f32.mxu0 0.0
    %543 = vmatmul.mubr.f32.gmra.mrb[0].mxu0 %v474
    %v544 = vpop.f32.mrb[0].mxu0
    %v545 = vadd.f32 %v136, %v544
    %v546 = vpop.f32.mrb[0].mxu0
    %547 = vdwg.mxu0
    %548 = vrot.lane.b32.xlu0 %v133, 120
    %v549 = vpop.permute.xlu0 %548
    %550 = vrot.lane.b32.xlu0 %v133, 88
    %v551 = vpop.permute.xlu0 %550
    %v552 = vsel %vm144, %v549, 0
    %v554 = vsel %vm144, %v551, 0
    %556 = vmatprep.subr.mxu0 0.0
    %557 = vmatpush1.xpose.msra.mxu0 %v554
    %558 = vmatprep.subr.mxu0 0.0
    %559 = vmatpush1.xpose.msra.mxu0 0.0
    %560 = vmatprep.subr.mxu0 0.0
    %561 = vmatpush1.xpose.msra.mxu0 0.0
    %562 = vmatprep.subr.mxu0 0.0
    %563 = vmatpush1.xpose.msra.mxu0 0.0
    %564 = vmatprep.subr.mxu0 0.0
    %565 = vmatpush1.xpose.msra.mxu0 0.0
    %566 = vmatprep.subr.mxu0 0.0
    %567 = vmatpush1.xpose.msra.mxu0 0.0
    %568 = vmatprep.subr.mxu0 0.0
    %569 = vmatpush1.xpose.msra.mxu0 0.0
    %570 = vmatprep.subr.mxu0 0.0
    %571 = vmatpush1.xpose.msra.mxu0 0.0
    %572 = vmatprep.subr.mxu0 0.0
    %573 = vmatpush1.xpose.msra.mxu0 0.0
    %574 = vmatprep.subr.mxu0 0.0
    %575 = vmatpush1.xpose.msra.mxu0 0.0
    %576 = vmatprep.subr.mxu0 0.0
    %577 = vmatpush1.xpose.msra.mxu0 0.0
    %578 = vmatprep.subr.mxu0 0.0
    %579 = vmatpush1.xpose.msra.mxu0 0.0
    %580 = vmatprep.subr.mxu0 0.0
    %581 = vmatpush1.xpose.msra.mxu0 0.0
    %582 = vmatprep.subr.mxu0 0.0
    %583 = vmatpush1.xpose.msra.mxu0 0.0
    %584 = vmatprep.subr.mxu0 0.0
    %585 = vmatpush1.xpose.msra.mxu0 0.0
    %586 = vmatprep.subr.mxu0 0.0
    %587 = vmatpush1.xpose.msra.mxu0 0.0
    %588 = vmatprep.subr.mxu0 0.0
    %589 = vmatpush1.xpose.msra.mxu0 0.0
    %590 = vmatprep.subr.mxu0 0.0
    %591 = vmatpush1.xpose.msra.mxu0 0.0
    %592 = vmatprep.subr.mxu0 0.0
    %593 = vmatpush1.xpose.msra.mxu0 0.0
    %594 = vmatprep.subr.mxu0 0.0
    %595 = vmatpush1.xpose.msra.mxu0 0.0
    %596 = vmatprep.subr.mxu0 0.0
    %597 = vmatpush1.xpose.msra.mxu0 0.0
    %598 = vmatprep.subr.mxu0 0.0
    %599 = vmatpush1.xpose.msra.mxu0 0.0
    %600 = vmatprep.subr.mxu0 0.0
    %601 = vmatpush1.xpose.msra.mxu0 0.0
    %602 = vmatprep.subr.mxu0 0.0
    %603 = vmatpush1.xpose.msra.mxu0 0.0
    %604 = vmatprep.subr.mxu0 0.0
    %605 = vmatpush1.xpose.msra.mxu0 0.0
    %606 = vmatprep.subr.mxu0 0.0
    %607 = vmatpush1.xpose.msra.mxu0 0.0
    %608 = vmatprep.subr.mxu0 0.0
    %609 = vmatpush1.xpose.msra.mxu0 0.0
    %610 = vmatprep.subr.mxu0 0.0
    %611 = vmatpush1.xpose.msra.mxu0 0.0
    %612 = vmatprep.subr.mxu0 0.0
    %613 = vmatpush1.xpose.msra.mxu0 0.0
    %614 = vmatprep.subr.mxu0 0.0
    %615 = vmatpush1.xpose.msra.mxu0 0.0
    %616 = vmatprep.subr.mxu0 0.0
    %617 = vmatpush1.xpose.msra.mxu0 0.0
    %618 = vmatprep.subr.mxu0 0.0
    %619 = vmatpush1.xpose.msra.mxu0 0.0
    %620 = vmatprep.mubr.f32.mxu0 0.0
    %621 = vmatmul.mubr.f32.gmra.mrb[0].mxu0 %v552
    %v622 = vpop.f32.mrb[0].mxu0
    %v623 = vadd.f32 %v136, %v622
    %v624 = vpop.f32.mrb[0].mxu0
    %625 = vdwg.mxu0
    %v626 = vsel %vm144, %v545, -inf
    %627 = vmax.xlane.f32.xlu0 %v626
    %v628 = vpop.xlane.xlu0 %627
    %v629 = vsel %vm144, %v623, -inf
    %630 = vmax.xlane.f32.xlu0 %v629
    %v631 = vpop.xlane.xlu0 %630
    %v632 = vsub.f32 %v545, %v628
    %v633 = vsub.f32 %v623, %v631
    %v634 = vmul.f32 %v632, 1.442695
    %v635 = vpow.pop %v634
    %v636 = vmul.f32 %v633, 1.442695
    %v637 = vpow.pop %v636
    %v638 = vsel %vm144, %v635, 0.0
    %639 = vadd.xlane.f32.xlu0 %v638
    %v640 = vpop.xlane.xlu0 %639
    %v641 = vsel %vm144, %v637, 0.0
    %642 = vadd.xlane.f32.xlu0 %v641
    %v643 = vpop.xlane.xlu0 %642
    %v644 = vrcp.pop %v640
    %v645 = vrcp.pop %v643
    %v646 = vmul.f32 %v635, %v644
    %v647 = vmul.f32 %v637, %v645
    %648 = vrot.lane.b32.xlu0 %v128, 56
    %v649 = vpop.permute.xlu0 %648
    %v652 = vsel %vm144, %v646, 0
    %654 = vmatprep.subr.mxu0 0.0
    %655 = vmatpush1.msra.mxu0 %v649
    %656 = vmatprep.subr.mxu0 0.0
    %657 = vmatpush1.msra.mxu0 0.0
    %658 = vmatprep.subr.mxu0 0.0
    %659 = vmatpush1.msra.mxu0 0.0
    %660 = vmatprep.subr.mxu0 0.0
    %661 = vmatpush1.msra.mxu0 0.0
    %662 = vmatprep.subr.mxu0 0.0
    %663 = vmatpush1.msra.mxu0 0.0
    %664 = vmatprep.subr.mxu0 0.0
    %665 = vmatpush1.msra.mxu0 0.0
    %666 = vmatprep.subr.mxu0 0.0
    %667 = vmatpush1.msra.mxu0 0.0
    %668 = vmatprep.subr.mxu0 0.0
    %669 = vmatpush1.msra.mxu0 0.0
    %670 = vmatprep.subr.mxu0 0.0
    %671 = vmatpush1.msra.mxu0 0.0
    %672 = vmatprep.subr.mxu0 0.0
    %673 = vmatpush1.msra.mxu0 0.0
    %674 = vmatprep.subr.mxu0 0.0
    %675 = vmatpush1.msra.mxu0 0.0
    %676 = vmatprep.subr.mxu0 0.0
    %677 = vmatpush1.msra.mxu0 0.0
    %678 = vmatprep.subr.mxu0 0.0
    %679 = vmatpush1.msra.mxu0 0.0
    %680 = vmatprep.subr.mxu0 0.0
    %681 = vmatpush1.msra.mxu0 0.0
    %682 = vmatprep.subr.mxu0 0.0
    %683 = vmatpush1.msra.mxu0 0.0
    %684 = vmatprep.subr.mxu0 0.0
    %685 = vmatpush1.msra.mxu0 0.0
    %686 = vmatprep.subr.mxu0 0.0
    %687 = vmatpush1.msra.mxu0 0.0
    %688 = vmatprep.subr.mxu0 0.0
    %689 = vmatpush1.msra.mxu0 0.0
    %690 = vmatprep.subr.mxu0 0.0
    %691 = vmatpush1.msra.mxu0 0.0
    %692 = vmatprep.subr.mxu0 0.0
    %693 = vmatpush1.msra.mxu0 0.0
    %694 = vmatprep.subr.mxu0 0.0
    %695 = vmatpush1.msra.mxu0 0.0
    %696 = vmatprep.subr.mxu0 0.0
    %697 = vmatpush1.msra.mxu0 0.0
    %698 = vmatprep.subr.mxu0 0.0
    %699 = vmatpush1.msra.mxu0 0.0
    %700 = vmatprep.subr.mxu0 0.0
    %701 = vmatpush1.msra.mxu0 0.0
    %702 = vmatprep.subr.mxu0 0.0
    %703 = vmatpush1.msra.mxu0 0.0
    %704 = vmatprep.subr.mxu0 0.0
    %705 = vmatpush1.msra.mxu0 0.0
    %706 = vmatprep.subr.mxu0 0.0
    %707 = vmatpush1.msra.mxu0 0.0
    %708 = vmatprep.subr.mxu0 0.0
    %709 = vmatpush1.msra.mxu0 0.0
    %710 = vmatprep.subr.mxu0 0.0
    %711 = vmatpush1.msra.mxu0 0.0
    %712 = vmatprep.subr.mxu0 0.0
    %713 = vmatpush1.msra.mxu0 0.0
    %714 = vmatprep.subr.mxu0 0.0
    %715 = vmatpush1.msra.mxu0 0.0
    %716 = vmatprep.subr.mxu0 0.0
    %717 = vmatpush1.msra.mxu0 0.0
    %718 = vmatprep.mubr.f32.mxu0 0.0
    %719 = vmatmul.mubr.f32.gmra.mrb[0].mxu0 %v652
    %v720 = vpop.f32.mrb[0].mxu0
    %v721 = vadd.f32 0.0, %v720
    %v722 = vpop.f32.mrb[0].mxu0
    %723 = vdwg.mxu0
    %724 = vrot.lane.b32.xlu0 %v133, 56
    %v725 = vpop.permute.xlu0 %724
    %v728 = vsel %vm144, %v647, 0
    %730 = vmatprep.subr.mxu0 0.0
    %731 = vmatpush1.msra.mxu0 %v725
    %732 = vmatprep.subr.mxu0 0.0
    %733 = vmatpush1.msra.mxu0 0.0
    %734 = vmatprep.subr.mxu0 0.0
    %735 = vmatpush1.msra.mxu0 0.0
    %736 = vmatprep.subr.mxu0 0.0
    %737 = vmatpush1.msra.mxu0 0.0
    %738 = vmatprep.subr.mxu0 0.0
    %739 = vmatpush1.msra.mxu0 0.0
    %740 = vmatprep.subr.mxu0 0.0
    %741 = vmatpush1.msra.mxu0 0.0
    %742 = vmatprep.subr.mxu0 0.0
    %743 = vmatpush1.msra.mxu0 0.0
    %744 = vmatprep.subr.mxu0 0.0
    %745 = vmatpush1.msra.mxu0 0.0
    %746 = vmatprep.subr.mxu0 0.0
    %747 = vmatpush1.msra.mxu0 0.0
    %748 = vmatprep.subr.mxu0 0.0
    %749 = vmatpush1.msra.mxu0 0.0
    %750 = vmatprep.subr.mxu0 0.0
    %751 = vmatpush1.msra.mxu0 0.0
    %752 = vmatprep.subr.mxu0 0.0
    %753 = vmatpush1.msra.mxu0 0.0
    %754 = vmatprep.subr.mxu0 0.0
    %755 = vmatpush1.msra.mxu0 0.0
    %756 = vmatprep.subr.mxu0 0.0
    %757 = vmatpush1.msra.mxu0 0.0
    %758 = vmatprep.subr.mxu0 0.0
    %759 = vmatpush1.msra.mxu0 0.0
    %760 = vmatprep.subr.mxu0 0.0
    %761 = vmatpush1.msra.mxu0 0.0
    %762 = vmatprep.subr.mxu0 0.0
    %763 = vmatpush1.msra.mxu0 0.0
    %764 = vmatprep.subr.mxu0 0.0
    %765 = vmatpush1.msra.mxu0 0.0
    %766 = vmatprep.subr.mxu0 0.0
    %767 = vmatpush1.msra.mxu0 0.0
    %768 = vmatprep.subr.mxu0 0.0
    %769 = vmatpush1.msra.mxu0 0.0
    %770 = vmatprep.subr.mxu0 0.0
    %771 = vmatpush1.msra.mxu0 0.0
    %772 = vmatprep.subr.mxu0 0.0
    %773 = vmatpush1.msra.mxu0 0.0
    %774 = vmatprep.subr.mxu0 0.0
    %775 = vmatpush1.msra.mxu0 0.0
    %776 = vmatprep.subr.mxu0 0.0
    %777 = vmatpush1.msra.mxu0 0.0
    %778 = vmatprep.subr.mxu0 0.0
    %779 = vmatpush1.msra.mxu0 0.0
    %780 = vmatprep.subr.mxu0 0.0
    %781 = vmatpush1.msra.mxu0 0.0
    %782 = vmatprep.subr.mxu0 0.0
    %783 = vmatpush1.msra.mxu0 0.0
    %784 = vmatprep.subr.mxu0 0.0
    %785 = vmatpush1.msra.mxu0 0.0
    %786 = vmatprep.subr.mxu0 0.0
    %787 = vmatpush1.msra.mxu0 0.0
    %788 = vmatprep.subr.mxu0 0.0
    %789 = vmatpush1.msra.mxu0 0.0
    %790 = vmatprep.subr.mxu0 0.0
    %791 = vmatpush1.msra.mxu0 0.0
    %792 = vmatprep.subr.mxu0 0.0
    %793 = vmatpush1.msra.mxu0 0.0
    %794 = vmatprep.mubr.f32.mxu0 0.0
    %795 = vmatmul.mubr.f32.gmra.mrb[0].mxu0 %v728
    %v796 = vpop.f32.mrb[0].mxu0
    %v797 = vadd.f32 0.0, %v796
    %v798 = vpop.f32.mrb[0].mxu0
    %799 = vdwg.mxu0
    %v801 = vsel %vm144, %v721, 0
    %v804 = vsel %vm144, %v797, 0
    %806 = vmatprep.subr.mxu0 0.0
    %807 = vmatpush1.msra.mxu0 %v138
    %808 = vmatprep.subr.mxu0 0.0
    %809 = vmatpush1.msra.mxu0 0.0
    %810 = vmatprep.subr.mxu0 0.0
    %811 = vmatpush1.msra.mxu0 0.0
    %812 = vmatprep.subr.mxu0 0.0
    %813 = vmatpush1.msra.mxu0 0.0
    %814 = vmatprep.subr.mxu0 0.0
    %815 = vmatpush1.msra.mxu0 0.0
    %816 = vmatprep.subr.mxu0 0.0
    %817 = vmatpush1.msra.mxu0 0.0
    %818 = vmatprep.subr.mxu0 0.0
    %819 = vmatpush1.msra.mxu0 0.0
    %820 = vmatprep.subr.mxu0 0.0
    %821 = vmatpush1.msra.mxu0 0.0
    %822 = vmatprep.subr.mxu0 0.0
    %823 = vmatpush1.msra.mxu0 0.0
    %824 = vmatprep.subr.mxu0 0.0
    %825 = vmatpush1.msra.mxu0 0.0
    %826 = vmatprep.subr.mxu0 0.0
    %827 = vmatpush1.msra.mxu0 0.0
    %828 = vmatprep.subr.mxu0 0.0
    %829 = vmatpush1.msra.mxu0 0.0
    %830 = vmatprep.subr.mxu0 0.0
    %831 = vmatpush1.msra.mxu0 0.0
    %832 = vmatprep.subr.mxu0 0.0
    %833 = vmatpush1.msra.mxu0 0.0
    %834 = vmatprep.subr.mxu0 0.0
    %835 = vmatpush1.msra.mxu0 0.0
    %836 = vmatprep.subr.mxu0 0.0
    %837 = vmatpush1.msra.mxu0 0.0
    %838 = vmatprep.subr.mxu0 0.0
    %839 = vmatpush1.msra.mxu0 0.0
    %840 = vmatprep.subr.mxu0 0.0
    %841 = vmatpush1.msra.mxu0 0.0
    %842 = vmatprep.subr.mxu0 0.0
    %843 = vmatpush1.msra.mxu0 0.0
    %844 = vmatprep.subr.mxu0 0.0
    %845 = vmatpush1.msra.mxu0 0.0
    %846 = vmatprep.subr.mxu0 0.0
    %847 = vmatpush1.msra.mxu0 0.0
    %848 = vmatprep.subr.mxu0 0.0
    %849 = vmatpush1.msra.mxu0 0.0
    %850 = vmatprep.subr.mxu0 0.0
    %851 = vmatpush1.msra.mxu0 0.0
    %852 = vmatprep.subr.mxu0 0.0
    %853 = vmatpush1.msra.mxu0 0.0
    %854 = vmatprep.subr.mxu0 0.0
    %855 = vmatpush1.msra.mxu0 0.0
    %856 = vmatprep.subr.mxu0 0.0
    %857 = vmatpush1.msra.mxu0 0.0
    %858 = vmatprep.subr.mxu0 0.0
    %859 = vmatpush1.msra.mxu0 0.0
    %860 = vmatprep.subr.mxu0 0.0
    %861 = vmatpush1.msra.mxu0 0.0
    %862 = vmatprep.subr.mxu0 0.0
    %863 = vmatpush1.msra.mxu0 0.0
    %864 = vmatprep.subr.mxu0 0.0
    %865 = vmatpush1.msra.mxu0 0.0
    %866 = vmatprep.subr.mxu0 0.0
    %867 = vmatpush1.msra.mxu0 0.0
    %868 = vmatprep.subr.mxu0 0.0
    %869 = vmatpush1.msra.mxu0 0.0
    %870 = vmatprep.mubr.f32.mxu0 0.0
    %871 = vmatmul.mubr.f32.gmra.mrb[0].mxu0 %v801
    %v872 = vpop.f32.mrb[0].mxu0
    %v873 = vadd.f32 0.0, %v872
    %v874 = vpop.f32.mrb[0].mxu0
    %875 = vmatprep.mubr.f32.mxu0 0.0
    %876 = vmatmul.mubr.f32.gmra.mrb[0].mxu0 %v804
    %v877 = vpop.f32.mrb[0].mxu0
    %v878 = vadd.f32 0.0, %v877
    %v879 = vpop.f32.mrb[0].mxu0
    %880 = vdwg.mxu0
    %v882 = vsel %vm144, %v391, 0
    %v885 = vsel %vm144, %v467, 0
    %887 = vmatprep.subr.mxu0 0.0
    %888 = vmatpush1.msra.mxu0 %v137
    %889 = vmatprep.subr.mxu0 0.0
    %890 = vmatpush1.msra.mxu0 0.0
    %891 = vmatprep.subr.mxu0 0.0
    %892 = vmatpush1.msra.mxu0 0.0
    %893 = vmatprep.subr.mxu0 0.0
    %894 = vmatpush1.msra.mxu0 0.0
    %895 = vmatprep.subr.mxu0 0.0
    %896 = vmatpush1.msra.mxu0 0.0
    %897 = vmatprep.subr.mxu0 0.0
    %898 = vmatpush1.msra.mxu0 0.0
    %899 = vmatprep.subr.mxu0 0.0
    %900 = vmatpush1.msra.mxu0 0.0
    %901 = vmatprep.subr.mxu0 0.0
    %902 = vmatpush1.msra.mxu0 0.0
    %903 = vmatprep.subr.mxu0 0.0
    %904 = vmatpush1.msra.mxu0 0.0
    %905 = vmatprep.subr.mxu0 0.0
    %906 = vmatpush1.msra.mxu0 0.0
    %907 = vmatprep.subr.mxu0 0.0
    %908 = vmatpush1.msra.mxu0 0.0
    %909 = vmatprep.subr.mxu0 0.0
    %910 = vmatpush1.msra.mxu0 0.0
    %911 = vmatprep.subr.mxu0 0.0
    %912 = vmatpush1.msra.mxu0 0.0
    %913 = vmatprep.subr.mxu0 0.0
    %914 = vmatpush1.msra.mxu0 0.0
    %915 = vmatprep.subr.mxu0 0.0
    %916 = vmatpush1.msra.mxu0 0.0
    %917 = vmatprep.subr.mxu0 0.0
    %918 = vmatpush1.msra.mxu0 0.0
    %919 = vmatprep.subr.mxu0 0.0
    %920 = vmatpush1.msra.mxu0 0.0
    %921 = vmatprep.subr.mxu0 0.0
    %922 = vmatpush1.msra.mxu0 0.0
    %923 = vmatprep.subr.mxu0 0.0
    %924 = vmatpush1.msra.mxu0 0.0
    %925 = vmatprep.subr.mxu0 0.0
    %926 = vmatpush1.msra.mxu0 0.0
    %927 = vmatprep.subr.mxu0 0.0
    %928 = vmatpush1.msra.mxu0 0.0
    %929 = vmatprep.subr.mxu0 0.0
    %930 = vmatpush1.msra.mxu0 0.0
    %931 = vmatprep.subr.mxu0 0.0
    %932 = vmatpush1.msra.mxu0 0.0
    %933 = vmatprep.subr.mxu0 0.0
    %934 = vmatpush1.msra.mxu0 0.0
    %935 = vmatprep.subr.mxu0 0.0
    %936 = vmatpush1.msra.mxu0 0.0
    %937 = vmatprep.subr.mxu0 0.0
    %938 = vmatpush1.msra.mxu0 0.0
    %939 = vmatprep.subr.mxu0 0.0
    %940 = vmatpush1.msra.mxu0 0.0
    %941 = vmatprep.subr.mxu0 0.0
    %942 = vmatpush1.msra.mxu0 0.0
    %943 = vmatprep.subr.mxu0 0.0
    %944 = vmatpush1.msra.mxu0 0.0
    %945 = vmatprep.subr.mxu0 0.0
    %946 = vmatpush1.msra.mxu0 0.0
    %947 = vmatprep.subr.mxu0 0.0
    %948 = vmatpush1.msra.mxu0 0.0
    %949 = vmatprep.subr.mxu0 0.0
    %950 = vmatpush1.msra.mxu0 0.0
    %951 = vmatprep.mubr.f32.mxu0 0.0
    %952 = vmatmul.mubr.f32.gmra.mrb[0].mxu0 %v882
    %v953 = vpop.f32.mrb[0].mxu0
    %v954 = vadd.f32 %v873, %v953
    %v955 = vpop.f32.mrb[0].mxu0
    %956 = vmatprep.mubr.f32.mxu0 0.0
    %957 = vmatmul.mubr.f32.gmra.mrb[0].mxu0 %v885
    %v958 = vpop.f32.mrb[0].mxu0
    %v959 = vadd.f32 %v878, %v958
    %v960 = vpop.f32.mrb[0].mxu0
    %961 = vdwg.mxu0
    %962 = vrot.lane.b32.xlu0 %v128, 112
    %v963 = vpop.permute.xlu0 %962
    %964 = vrot.lane.b32.xlu0 %v128, 80
    %v965 = vpop.permute.xlu0 %964
    %v966 = vsel %vm144, %v963, 0
    %v968 = vsel %vm144, %v965, 0
    %970 = vmatprep.subr.mxu0 0.0
    %971 = vmatpush1.xpose.msra.mxu0 %v968
    %972 = vmatprep.subr.mxu0 0.0
    %973 = vmatpush1.xpose.msra.mxu0 0.0
    %974 = vmatprep.subr.mxu0 0.0
    %975 = vmatpush1.xpose.msra.mxu0 0.0
    %976 = vmatprep.subr.mxu0 0.0
    %977 = vmatpush1.xpose.msra.mxu0 0.0
    %978 = vmatprep.subr.mxu0 0.0
    %979 = vmatpush1.xpose.msra.mxu0 0.0
    %980 = vmatprep.subr.mxu0 0.0
    %981 = vmatpush1.xpose.msra.mxu0 0.0
    %982 = vmatprep.subr.mxu0 0.0
    %983 = vmatpush1.xpose.msra.mxu0 0.0
    %984 = vmatprep.subr.mxu0 0.0
    %985 = vmatpush1.xpose.msra.mxu0 0.0
    %986 = vmatprep.subr.mxu0 0.0
    %987 = vmatpush1.xpose.msra.mxu0 0.0
    %988 = vmatprep.subr.mxu0 0.0
    %989 = vmatpush1.xpose.msra.mxu0 0.0
    %990 = vmatprep.subr.mxu0 0.0
    %991 = vmatpush1.xpose.msra.mxu0 0.0
    %992 = vmatprep.subr.mxu0 0.0
    %993 = vmatpush1.xpose.msra.mxu0 0.0
    %994 = vmatprep.subr.mxu0 0.0
    %995 = vmatpush1.xpose.msra.mxu0 0.0
    %996 = vmatprep.subr.mxu0 0.0
    %997 = vmatpush1.xpose.msra.mxu0 0.0
    %998 = vmatprep.subr.mxu0 0.0
    %999 = vmatpush1.xpose.msra.mxu0 0.0
    %1000 = vmatprep.subr.mxu0 0.0
    %1001 = vmatpush1.xpose.msra.mxu0 0.0
    %1002 = vmatprep.subr.mxu0 0.0
    %1003 = vmatpush1.xpose.msra.mxu0 0.0
    %1004 = vmatprep.subr.mxu0 0.0
    %1005 = vmatpush1.xpose.msra.mxu0 0.0
    %1006 = vmatprep.subr.mxu0 0.0
    %1007 = vmatpush1.xpose.msra.mxu0 0.0
    %1008 = vmatprep.subr.mxu0 0.0
    %1009 = vmatpush1.xpose.msra.mxu0 0.0
    %1010 = vmatprep.subr.mxu0 0.0
    %1011 = vmatpush1.xpose.msra.mxu0 0.0
    %1012 = vmatprep.subr.mxu0 0.0
    %1013 = vmatpush1.xpose.msra.mxu0 0.0
    %1014 = vmatprep.subr.mxu0 0.0
    %1015 = vmatpush1.xpose.msra.mxu0 0.0
    %1016 = vmatprep.subr.mxu0 0.0
    %1017 = vmatpush1.xpose.msra.mxu0 0.0
    %1018 = vmatprep.subr.mxu0 0.0
    %1019 = vmatpush1.xpose.msra.mxu0 0.0
    %1020 = vmatprep.subr.mxu0 0.0
    %1021 = vmatpush1.xpose.msra.mxu0 0.0
    %1022 = vmatprep.subr.mxu0 0.0
    %1023 = vmatpush1.xpose.msra.mxu0 0.0
    %1024 = vmatprep.subr.mxu0 0.0
    %1025 = vmatpush1.xpose.msra.mxu0 0.0
    %1026 = vmatprep.subr.mxu0 0.0
    %1027 = vmatpush1.xpose.msra.mxu0 0.0
    %1028 = vmatprep.subr.mxu0 0.0
    %1029 = vmatpush1.xpose.msra.mxu0 0.0
    %1030 = vmatprep.subr.mxu0 0.0
    %1031 = vmatpush1.xpose.msra.mxu0 0.0
    %1032 = vmatprep.subr.mxu0 0.0
    %1033 = vmatpush1.xpose.msra.mxu0 0.0
    %1034 = vmatprep.mubr.f32.mxu0 0.0
    %1035 = vmatmul.mubr.f32.gmra.mrb[0].mxu0 %v966
    %v1036 = vpop.f32.mrb[0].mxu0
    %v1037 = vadd.f32 %v136, %v1036
    %v1038 = vpop.f32.mrb[0].mxu0
    %1039 = vdwg.mxu0
    %1040 = vrot.lane.b32.xlu0 %v133, 112
    %v1041 = vpop.permute.xlu0 %1040
    %1042 = vrot.lane.b32.xlu0 %v133, 80
    %v1043 = vpop.permute.xlu0 %1042
    %v1044 = vsel %vm144, %v1041, 0
    %v1046 = vsel %vm144, %v1043, 0
    %1048 = vmatprep.subr.mxu0 0.0
    %1049 = vmatpush1.xpose.msra.mxu0 %v1046
    %1050 = vmatprep.subr.mxu0 0.0
    %1051 = vmatpush1.xpose.msra.mxu0 0.0
    %1052 = vmatprep.subr.mxu0 0.0
    %1053 = vmatpush1.xpose.msra.mxu0 0.0
    %1054 = vmatprep.subr.mxu0 0.0
    %1055 = vmatpush1.xpose.msra.mxu0 0.0
    %1056 = vmatprep.subr.mxu0 0.0
    %1057 = vmatpush1.xpose.msra.mxu0 0.0
    %1058 = vmatprep.subr.mxu0 0.0
    %1059 = vmatpush1.xpose.msra.mxu0 0.0
    %1060 = vmatprep.subr.mxu0 0.0
    %1061 = vmatpush1.xpose.msra.mxu0 0.0
    %1062 = vmatprep.subr.mxu0 0.0
    %1063 = vmatpush1.xpose.msra.mxu0 0.0
    %1064 = vmatprep.subr.mxu0 0.0
    %1065 = vmatpush1.xpose.msra.mxu0 0.0
    %1066 = vmatprep.subr.mxu0 0.0
    %1067 = vmatpush1.xpose.msra.mxu0 0.0
    %1068 = vmatprep.subr.mxu0 0.0
    %1069 = vmatpush1.xpose.msra.mxu0 0.0
    %1070 = vmatprep.subr.mxu0 0.0
    %1071 = vmatpush1.xpose.msra.mxu0 0.0
    %1072 = vmatprep.subr.mxu0 0.0
    %1073 = vmatpush1.xpose.msra.mxu0 0.0
    %1074 = vmatprep.subr.mxu0 0.0
    %1075 = vmatpush1.xpose.msra.mxu0 0.0
    %1076 = vmatprep.subr.mxu0 0.0
    %1077 = vmatpush1.xpose.msra.mxu0 0.0
    %1078 = vmatprep.subr.mxu0 0.0
    %1079 = vmatpush1.xpose.msra.mxu0 0.0
    %1080 = vmatprep.subr.mxu0 0.0
    %1081 = vmatpush1.xpose.msra.mxu0 0.0
    %1082 = vmatprep.subr.mxu0 0.0
    %1083 = vmatpush1.xpose.msra.mxu0 0.0
    %1084 = vmatprep.subr.mxu0 0.0
    %1085 = vmatpush1.xpose.msra.mxu0 0.0
    %1086 = vmatprep.subr.mxu0 0.0
    %1087 = vmatpush1.xpose.msra.mxu0 0.0
    %1088 = vmatprep.subr.mxu0 0.0
    %1089 = vmatpush1.xpose.msra.mxu0 0.0
    %1090 = vmatprep.subr.mxu0 0.0
    %1091 = vmatpush1.xpose.msra.mxu0 0.0
    %1092 = vmatprep.subr.mxu0 0.0
    %1093 = vmatpush1.xpose.msra.mxu0 0.0
    %1094 = vmatprep.subr.mxu0 0.0
    %1095 = vmatpush1.xpose.msra.mxu0 0.0
    %1096 = vmatprep.subr.mxu0 0.0
    %1097 = vmatpush1.xpose.msra.mxu0 0.0
    %1098 = vmatprep.subr.mxu0 0.0
    %1099 = vmatpush1.xpose.msra.mxu0 0.0
    %1100 = vmatprep.subr.mxu0 0.0
    %1101 = vmatpush1.xpose.msra.mxu0 0.0
    %1102 = vmatprep.subr.mxu0 0.0
    %1103 = vmatpush1.xpose.msra.mxu0 0.0
    %1104 = vmatprep.subr.mxu0 0.0
    %1105 = vmatpush1.xpose.msra.mxu0 0.0
    %1106 = vmatprep.subr.mxu0 0.0
    %1107 = vmatpush1.xpose.msra.mxu0 0.0
    %1108 = vmatprep.subr.mxu0 0.0
    %1109 = vmatpush1.xpose.msra.mxu0 0.0
    %1110 = vmatprep.subr.mxu0 0.0
    %1111 = vmatpush1.xpose.msra.mxu0 0.0
    %1112 = vmatprep.mubr.f32.mxu0 0.0
    %1113 = vmatmul.mubr.f32.gmra.mrb[0].mxu0 %v1044
    %v1114 = vpop.f32.mrb[0].mxu0
    %v1115 = vadd.f32 %v136, %v1114
    %v1116 = vpop.f32.mrb[0].mxu0
    %1117 = vdwg.mxu0
    %v1118 = vsel %vm144, %v1037, -inf
    %1119 = vmax.xlane.f32.xlu0 %v1118
    %v1120 = vpop.xlane.xlu0 %1119
    %v1121 = vsel %vm144, %v1115, -inf
    %1122 = vmax.xlane.f32.xlu0 %v1121
    %v1123 = vpop.xlane.xlu0 %1122
    %v1124 = vsub.f32 %v1037, %v1120
    %v1125 = vsub.f32 %v1115, %v1123
    %v1126 = vmul.f32 %v1124, 1.442695
    %v1127 = vpow.pop %v1126
    %v1128 = vmul.f32 %v1125, 1.442695
    %v1129 = vpow.pop %v1128
    %v1130 = vsel %vm144, %v1127, 0.0
    %1131 = vadd.xlane.f32.xlu0 %v1130
    %v1132 = vpop.xlane.xlu0 %1131
    %v1133 = vsel %vm144, %v1129, 0.0
    %1134 = vadd.xlane.f32.xlu0 %v1133
    %v1135 = vpop.xlane.xlu0 %1134
    %v1136 = vrcp.pop %v1132
    %v1137 = vrcp.pop %v1135
    %v1138 = vmul.f32 %v1127, %v1136
    %v1139 = vmul.f32 %v1129, %v1137
    %1140 = vrot.lane.b32.xlu0 %v128, 48
    %v1141 = vpop.permute.xlu0 %1140
    %v1144 = vsel %vm144, %v1138, 0
    %1146 = vmatprep.subr.mxu0 0.0
    %1147 = vmatpush1.msra.mxu0 %v1141
    %1148 = vmatprep.subr.mxu0 0.0
    %1149 = vmatpush1.msra.mxu0 0.0
    %1150 = vmatprep.subr.mxu0 0.0
    %1151 = vmatpush1.msra.mxu0 0.0
    %1152 = vmatprep.subr.mxu0 0.0
    %1153 = vmatpush1.msra.mxu0 0.0
    %1154 = vmatprep.subr.mxu0 0.0
    %1155 = vmatpush1.msra.mxu0 0.0
    %1156 = vmatprep.subr.mxu0 0.0
    %1157 = vmatpush1.msra.mxu0 0.0
    %1158 = vmatprep.subr.mxu0 0.0
    %1159 = vmatpush1.msra.mxu0 0.0
    %1160 = vmatprep.subr.mxu0 0.0
    %1161 = vmatpush1.msra.mxu0 0.0
    %1162 = vmatprep.subr.mxu0 0.0
    %1163 = vmatpush1.msra.mxu0 0.0
    %1164 = vmatprep.subr.mxu0 0.0
    %1165 = vmatpush1.msra.mxu0 0.0
    %1166 = vmatprep.subr.mxu0 0.0
    %1167 = vmatpush1.msra.mxu0 0.0
    %1168 = vmatprep.subr.mxu0 0.0
    %1169 = vmatpush1.msra.mxu0 0.0
    %1170 = vmatprep.subr.mxu0 0.0
    %1171 = vmatpush1.msra.mxu0 0.0
    %1172 = vmatprep.subr.mxu0 0.0
    %1173 = vmatpush1.msra.mxu0 0.0
    %1174 = vmatprep.subr.mxu0 0.0
    %1175 = vmatpush1.msra.mxu0 0.0
    %1176 = vmatprep.subr.mxu0 0.0
    %1177 = vmatpush1.msra.mxu0 0.0
    %1178 = vmatprep.subr.mxu0 0.0
    %1179 = vmatpush1.msra.mxu0 0.0
    %1180 = vmatprep.subr.mxu0 0.0
    %1181 = vmatpush1.msra.mxu0 0.0
    %1182 = vmatprep.subr.mxu0 0.0
    %1183 = vmatpush1.msra.mxu0 0.0
    %1184 = vmatprep.subr.mxu0 0.0
    %1185 = vmatpush1.msra.mxu0 0.0
    %1186 = vmatprep.subr.mxu0 0.0
    %1187 = vmatpush1.msra.mxu0 0.0
    %1188 = vmatprep.subr.mxu0 0.0
    %1189 = vmatpush1.msra.mxu0 0.0
    %1190 = vmatprep.subr.mxu0 0.0
    %1191 = vmatpush1.msra.mxu0 0.0
    %1192 = vmatprep.subr.mxu0 0.0
    %1193 = vmatpush1.msra.mxu0 0.0
    %1194 = vmatprep.subr.mxu0 0.0
    %1195 = vmatpush1.msra.mxu0 0.0
    %1196 = vmatprep.subr.mxu0 0.0
    %1197 = vmatpush1.msra.mxu0 0.0
    %1198 = vmatprep.subr.mxu0 0.0
    %1199 = vmatpush1.msra.mxu0 0.0
    %1200 = vmatprep.subr.mxu0 0.0
    %1201 = vmatpush1.msra.mxu0 0.0
    %1202 = vmatprep.subr.mxu0 0.0
    %1203 = vmatpush1.msra.mxu0 0.0
    %1204 = vmatprep.subr.mxu0 0.0
    %1205 = vmatpush1.msra.mxu0 0.0
    %1206 = vmatprep.subr.mxu0 0.0
    %1207 = vmatpush1.msra.mxu0 0.0
    %1208 = vmatprep.subr.mxu0 0.0
    %1209 = vmatpush1.msra.mxu0 0.0
    %1210 = vmatprep.mubr.f32.mxu0 0.0
    %1211 = vmatmul.mubr.f32.gmra.mrb[0].mxu0 %v1144
    %v1212 = vpop.f32.mrb[0].mxu0
    %v1213 = vadd.f32 0.0, %v1212
    %v1214 = vpop.f32.mrb[0].mxu0
    %1215 = vdwg.mxu0
    %1216 = vrot.lane.b32.xlu0 %v133, 48
    %v1217 = vpop.permute.xlu0 %1216
    %v1220 = vsel %vm144, %v1139, 0
    %1222 = vmatprep.subr.mxu0 0.0
    %1223 = vmatpush1.msra.mxu0 %v1217
    %1224 = vmatprep.subr.mxu0 0.0
    %1225 = vmatpush1.msra.mxu0 0.0
    %1226 = vmatprep.subr.mxu0 0.0
    %1227 = vmatpush1.msra.mxu0 0.0
    %1228 = vmatprep.subr.mxu0 0.0
    %1229 = vmatpush1.msra.mxu0 0.0
    %1230 = vmatprep.subr.mxu0 0.0
    %1231 = vmatpush1.msra.mxu0 0.0
    %1232 = vmatprep.subr.mxu0 0.0
    %1233 = vmatpush1.msra.mxu0 0.0
    %1234 = vmatprep.subr.mxu0 0.0
    %1235 = vmatpush1.msra.mxu0 0.0
    %1236 = vmatprep.subr.mxu0 0.0
    %1237 = vmatpush1.msra.mxu0 0.0
    %1238 = vmatprep.subr.mxu0 0.0
    %1239 = vmatpush1.msra.mxu0 0.0
    %1240 = vmatprep.subr.mxu0 0.0
    %1241 = vmatpush1.msra.mxu0 0.0
    %1242 = vmatprep.subr.mxu0 0.0
    %1243 = vmatpush1.msra.mxu0 0.0
    %1244 = vmatprep.subr.mxu0 0.0
    %1245 = vmatpush1.msra.mxu0 0.0
    %1246 = vmatprep.subr.mxu0 0.0
    %1247 = vmatpush1.msra.mxu0 0.0
    %1248 = vmatprep.subr.mxu0 0.0
    %1249 = vmatpush1.msra.mxu0 0.0
    %1250 = vmatprep.subr.mxu0 0.0
    %1251 = vmatpush1.msra.mxu0 0.0
    %1252 = vmatprep.subr.mxu0 0.0
    %1253 = vmatpush1.msra.mxu0 0.0
    %1254 = vmatprep.subr.mxu0 0.0
    %1255 = vmatpush1.msra.mxu0 0.0
    %1256 = vmatprep.subr.mxu0 0.0
    %1257 = vmatpush1.msra.mxu0 0.0
    %1258 = vmatprep.subr.mxu0 0.0
    %1259 = vmatpush1.msra.mxu0 0.0
    %1260 = vmatprep.subr.mxu0 0.0
    %1261 = vmatpush1.msra.mxu0 0.0
    %1262 = vmatprep.subr.mxu0 0.0
    %1263 = vmatpush1.msra.mxu0 0.0
    %1264 = vmatprep.subr.mxu0 0.0
    %1265 = vmatpush1.msra.mxu0 0.0
    %1266 = vmatprep.subr.mxu0 0.0
    %1267 = vmatpush1.msra.mxu0 0.0
    %1268 = vmatprep.subr.mxu0 0.0
    %1269 = vmatpush1.msra.mxu0 0.0
    %1270 = vmatprep.subr.mxu0 0.0
    %1271 = vmatpush1.msra.mxu0 0.0
    %1272 = vmatprep.subr.mxu0 0.0
    %1273 = vmatpush1.msra.mxu0 0.0
    %1274 = vmatprep.subr.mxu0 0.0
    %1275 = vmatpush1.msra.mxu0 0.0
    %1276 = vmatprep.subr.mxu0 0.0
    %1277 = vmatpush1.msra.mxu0 0.0
    %1278 = vmatprep.subr.mxu0 0.0
    %1279 = vmatpush1.msra.mxu0 0.0
    %1280 = vmatprep.subr.mxu0 0.0
    %1281 = vmatpush1.msra.mxu0 0.0
    %1282 = vmatprep.subr.mxu0 0.0
    %1283 = vmatpush1.msra.mxu0 0.0
    %1284 = vmatprep.subr.mxu0 0.0
    %1285 = vmatpush1.msra.mxu0 0.0
    %1286 = vmatprep.mubr.f32.mxu0 0.0
    %1287 = vmatmul.mubr.f32.gmra.mrb[0].mxu0 %v1220
    %v1288 = vpop.f32.mrb[0].mxu0
    %v1289 = vadd.f32 0.0, %v1288
    %v1290 = vpop.f32.mrb[0].mxu0
    %1291 = vdwg.mxu0
    %v1293 = vsel %vm144, %v1213, 0
    %v1296 = vsel %vm144, %v1289, 0
    %1298 = vmatprep.subr.mxu0 0.0
    %1299 = vmatpush1.msra.mxu0 %v139
    %1300 = vmatprep.subr.mxu0 0.0
    %1301 = vmatpush1.msra.mxu0 0.0
    %1302 = vmatprep.subr.mxu0 0.0
    %1303 = vmatpush1.msra.mxu0 0.0
    %1304 = vmatprep.subr.mxu0 0.0
    %1305 = vmatpush1.msra.mxu0 0.0
    %1306 = vmatprep.subr.mxu0 0.0
    %1307 = vmatpush1.msra.mxu0 0.0
    %1308 = vmatprep.subr.mxu0 0.0
    %1309 = vmatpush1.msra.mxu0 0.0
    %1310 = vmatprep.subr.mxu0 0.0
    %1311 = vmatpush1.msra.mxu0 0.0
    %1312 = vmatprep.subr.mxu0 0.0
    %1313 = vmatpush1.msra.mxu0 0.0
    %1314 = vmatprep.subr.mxu0 0.0
    %1315 = vmatpush1.msra.mxu0 0.0
    %1316 = vmatprep.subr.mxu0 0.0
    %1317 = vmatpush1.msra.mxu0 0.0
    %1318 = vmatprep.subr.mxu0 0.0
    %1319 = vmatpush1.msra.mxu0 0.0
    %1320 = vmatprep.subr.mxu0 0.0
    %1321 = vmatpush1.msra.mxu0 0.0
    %1322 = vmatprep.subr.mxu0 0.0
    %1323 = vmatpush1.msra.mxu0 0.0
    %1324 = vmatprep.subr.mxu0 0.0
    %1325 = vmatpush1.msra.mxu0 0.0
    %1326 = vmatprep.subr.mxu0 0.0
    %1327 = vmatpush1.msra.mxu0 0.0
    %1328 = vmatprep.subr.mxu0 0.0
    %1329 = vmatpush1.msra.mxu0 0.0
    %1330 = vmatprep.subr.mxu0 0.0
    %1331 = vmatpush1.msra.mxu0 0.0
    %1332 = vmatprep.subr.mxu0 0.0
    %1333 = vmatpush1.msra.mxu0 0.0
    %1334 = vmatprep.subr.mxu0 0.0
    %1335 = vmatpush1.msra.mxu0 0.0
    %1336 = vmatprep.subr.mxu0 0.0
    %1337 = vmatpush1.msra.mxu0 0.0
    %1338 = vmatprep.subr.mxu0 0.0
    %1339 = vmatpush1.msra.mxu0 0.0
    %1340 = vmatprep.subr.mxu0 0.0
    %1341 = vmatpush1.msra.mxu0 0.0
    %1342 = vmatprep.subr.mxu0 0.0
    %1343 = vmatpush1.msra.mxu0 0.0
    %1344 = vmatprep.subr.mxu0 0.0
    %1345 = vmatpush1.msra.mxu0 0.0
    %1346 = vmatprep.subr.mxu0 0.0
    %1347 = vmatpush1.msra.mxu0 0.0
    %1348 = vmatprep.subr.mxu0 0.0
    %1349 = vmatpush1.msra.mxu0 0.0
    %1350 = vmatprep.subr.mxu0 0.0
    %1351 = vmatpush1.msra.mxu0 0.0
    %1352 = vmatprep.subr.mxu0 0.0
    %1353 = vmatpush1.msra.mxu0 0.0
    %1354 = vmatprep.subr.mxu0 0.0
    %1355 = vmatpush1.msra.mxu0 0.0
    %1356 = vmatprep.subr.mxu0 0.0
    %1357 = vmatpush1.msra.mxu0 0.0
    %1358 = vmatprep.subr.mxu0 0.0
    %1359 = vmatpush1.msra.mxu0 0.0
    %1360 = vmatprep.subr.mxu0 0.0
    %1361 = vmatpush1.msra.mxu0 0.0
    %1362 = vmatprep.mubr.f32.mxu0 0.0
    %1363 = vmatmul.mubr.f32.gmra.mrb[0].mxu0 %v1293
    %v1364 = vpop.f32.mrb[0].mxu0
    %v1365 = vadd.f32 0.0, %v1364
    %v1366 = vpop.f32.mrb[0].mxu0
    %1367 = vmatprep.mubr.f32.mxu0 0.0
    %1368 = vmatmul.mubr.f32.gmra.mrb[0].mxu0 %v1296
    %v1369 = vpop.f32.mrb[0].mxu0
    %v1370 = vadd.f32 0.0, %v1369
    %v1371 = vpop.f32.mrb[0].mxu0
    %1372 = vdwg.mxu0
    %v1373 = vadd.f32 %v954, %v1365
    %v1374 = vadd.f32 %v959, %v1370
    %1375 = vrot.lane.b32.xlu0 %v128, 104
    %v1376 = vpop.permute.xlu0 %1375
    %1377 = vrot.lane.b32.xlu0 %v128, 72
    %v1378 = vpop.permute.xlu0 %1377
    %v1379 = vsel %vm144, %v1376, 0
    %v1381 = vsel %vm144, %v1378, 0
    %1383 = vmatprep.subr.mxu0 0.0
    %1384 = vmatpush1.xpose.msra.mxu0 %v1381
    %1385 = vmatprep.subr.mxu0 0.0
    %1386 = vmatpush1.xpose.msra.mxu0 0.0
    %1387 = vmatprep.subr.mxu0 0.0
    %1388 = vmatpush1.xpose.msra.mxu0 0.0
    %1389 = vmatprep.subr.mxu0 0.0
    %1390 = vmatpush1.xpose.msra.mxu0 0.0
    %1391 = vmatprep.subr.mxu0 0.0
    %1392 = vmatpush1.xpose.msra.mxu0 0.0
    %1393 = vmatprep.subr.mxu0 0.0
    %1394 = vmatpush1.xpose.msra.mxu0 0.0
    %1395 = vmatprep.subr.mxu0 0.0
    %1396 = vmatpush1.xpose.msra.mxu0 0.0
    %1397 = vmatprep.subr.mxu0 0.0
    %1398 = vmatpush1.xpose.msra.mxu0 0.0
    %1399 = vmatprep.subr.mxu0 0.0
    %1400 = vmatpush1.xpose.msra.mxu0 0.0
    %1401 = vmatprep.subr.mxu0 0.0
    %1402 = vmatpush1.xpose.msra.mxu0 0.0
    %1403 = vmatprep.subr.mxu0 0.0
    %1404 = vmatpush1.xpose.msra.mxu0 0.0
    %1405 = vmatprep.subr.mxu0 0.0
    %1406 = vmatpush1.xpose.msra.mxu0 0.0
    %1407 = vmatprep.subr.mxu0 0.0
    %1408 = vmatpush1.xpose.msra.mxu0 0.0
    %1409 = vmatprep.subr.mxu0 0.0
    %1410 = vmatpush1.xpose.msra.mxu0 0.0
    %1411 = vmatprep.subr.mxu0 0.0
    %1412 = vmatpush1.xpose.msra.mxu0 0.0
    %1413 = vmatprep.subr.mxu0 0.0
    %1414 = vmatpush1.xpose.msra.mxu0 0.0
    %1415 = vmatprep.subr.mxu0 0.0
    %1416 = vmatpush1.xpose.msra.mxu0 0.0
    %1417 = vmatprep.subr.mxu0 0.0
    %1418 = vmatpush1.xpose.msra.mxu0 0.0
    %1419 = vmatprep.subr.mxu0 0.0
    %1420 = vmatpush1.xpose.msra.mxu0 0.0
    %1421 = vmatprep.subr.mxu0 0.0
    %1422 = vmatpush1.xpose.msra.mxu0 0.0
    %1423 = vmatprep.subr.mxu0 0.0
    %1424 = vmatpush1.xpose.msra.mxu0 0.0
    %1425 = vmatprep.subr.mxu0 0.0
    %1426 = vmatpush1.xpose.msra.mxu0 0.0
    %1427 = vmatprep.subr.mxu0 0.0
    %1428 = vmatpush1.xpose.msra.mxu0 0.0
    %1429 = vmatprep.subr.mxu0 0.0
    %1430 = vmatpush1.xpose.msra.mxu0 0.0
    %1431 = vmatprep.subr.mxu0 0.0
    %1432 = vmatpush1.xpose.msra.mxu0 0.0
    %1433 = vmatprep.subr.mxu0 0.0
    %1434 = vmatpush1.xpose.msra.mxu0 0.0
    %1435 = vmatprep.subr.mxu0 0.0
    %1436 = vmatpush1.xpose.msra.mxu0 0.0
    %1437 = vmatprep.subr.mxu0 0.0
    %1438 = vmatpush1.xpose.msra.mxu0 0.0
    %1439 = vmatprep.subr.mxu0 0.0
    %1440 = vmatpush1.xpose.msra.mxu0 0.0
    %1441 = vmatprep.subr.mxu0 0.0
    %1442 = vmatpush1.xpose.msra.mxu0 0.0
    %1443 = vmatprep.subr.mxu0 0.0
    %1444 = vmatpush1.xpose.msra.mxu0 0.0
    %1445 = vmatprep.subr.mxu0 0.0
    %1446 = vmatpush1.xpose.msra.mxu0 0.0
    %1447 = vmatprep.mubr.f32.mxu0 0.0
    %1448 = vmatmul.mubr.f32.gmra.mrb[0].mxu0 %v1379
    %v1449 = vpop.f32.mrb[0].mxu0
    %v1450 = vadd.f32 %v136, %v1449
    %v1451 = vpop.f32.mrb[0].mxu0
    %1452 = vdwg.mxu0
    %1453 = vrot.lane.b32.xlu0 %v133, 104
    %v1454 = vpop.permute.xlu0 %1453
    %1455 = vrot.lane.b32.xlu0 %v133, 72
    %v1456 = vpop.permute.xlu0 %1455
    %v1457 = vsel %vm144, %v1454, 0
    %v1459 = vsel %vm144, %v1456, 0
    %1461 = vmatprep.subr.mxu0 0.0
    %1462 = vmatpush1.xpose.msra.mxu0 %v1459
    %1463 = vmatprep.subr.mxu0 0.0
    %1464 = vmatpush1.xpose.msra.mxu0 0.0
    %1465 = vmatprep.subr.mxu0 0.0
    %1466 = vmatpush1.xpose.msra.mxu0 0.0
    %1467 = vmatprep.subr.mxu0 0.0
    %1468 = vmatpush1.xpose.msra.mxu0 0.0
    %1469 = vmatprep.subr.mxu0 0.0
    %1470 = vmatpush1.xpose.msra.mxu0 0.0
    %1471 = vmatprep.subr.mxu0 0.0
    %1472 = vmatpush1.xpose.msra.mxu0 0.0
    %1473 = vmatprep.subr.mxu0 0.0
    %1474 = vmatpush1.xpose.msra.mxu0 0.0
    %1475 = vmatprep.subr.mxu0 0.0
    %1476 = vmatpush1.xpose.msra.mxu0 0.0
    %1477 = vmatprep.subr.mxu0 0.0
    %1478 = vmatpush1.xpose.msra.mxu0 0.0
    %1479 = vmatprep.subr.mxu0 0.0
    %1480 = vmatpush1.xpose.msra.mxu0 0.0
    %1481 = vmatprep.subr.mxu0 0.0
    %1482 = vmatpush1.xpose.msra.mxu0 0.0
    %1483 = vmatprep.subr.mxu0 0.0
    %1484 = vmatpush1.xpose.msra.mxu0 0.0
    %1485 = vmatprep.subr.mxu0 0.0
    %1486 = vmatpush1.xpose.msra.mxu0 0.0
    %1487 = vmatprep.subr.mxu0 0.0
    %1488 = vmatpush1.xpose.msra.mxu0 0.0
    %1489 = vmatprep.subr.mxu0 0.0
    %1490 = vmatpush1.xpose.msra.mxu0 0.0
    %1491 = vmatprep.subr.mxu0 0.0
    %1492 = vmatpush1.xpose.msra.mxu0 0.0
    %1493 = vmatprep.subr.mxu0 0.0
    %1494 = vmatpush1.xpose.msra.mxu0 0.0
    %1495 = vmatprep.subr.mxu0 0.0
    %1496 = vmatpush1.xpose.msra.mxu0 0.0
    %1497 = vmatprep.subr.mxu0 0.0
    %1498 = vmatpush1.xpose.msra.mxu0 0.0
    %1499 = vmatprep.subr.mxu0 0.0
    %1500 = vmatpush1.xpose.msra.mxu0 0.0
    %1501 = vmatprep.subr.mxu0 0.0
    %1502 = vmatpush1.xpose.msra.mxu0 0.0
    %1503 = vmatprep.subr.mxu0 0.0
    %1504 = vmatpush1.xpose.msra.mxu0 0.0
    %1505 = vmatprep.subr.mxu0 0.0
    %1506 = vmatpush1.xpose.msra.mxu0 0.0
    %1507 = vmatprep.subr.mxu0 0.0
    %1508 = vmatpush1.xpose.msra.mxu0 0.0
    %1509 = vmatprep.subr.mxu0 0.0
    %1510 = vmatpush1.xpose.msra.mxu0 0.0
    %1511 = vmatprep.subr.mxu0 0.0
    %1512 = vmatpush1.xpose.msra.mxu0 0.0
    %1513 = vmatprep.subr.mxu0 0.0
    %1514 = vmatpush1.xpose.msra.mxu0 0.0
    %1515 = vmatprep.subr.mxu0 0.0
    %1516 = vmatpush1.xpose.msra.mxu0 0.0
    %1517 = vmatprep.subr.mxu0 0.0
    %1518 = vmatpush1.xpose.msra.mxu0 0.0
    %1519 = vmatprep.subr.mxu0 0.0
    %1520 = vmatpush1.xpose.msra.mxu0 0.0
    %1521 = vmatprep.subr.mxu0 0.0
    %1522 = vmatpush1.xpose.msra.mxu0 0.0
    %1523 = vmatprep.subr.mxu0 0.0
    %1524 = vmatpush1.xpose.msra.mxu0 0.0
    %1525 = vmatprep.mubr.f32.mxu0 0.0
    %1526 = vmatmul.mubr.f32.gmra.mrb[0].mxu0 %v1457
    %v1527 = vpop.f32.mrb[0].mxu0
    %v1528 = vadd.f32 %v136, %v1527
    %v1529 = vpop.f32.mrb[0].mxu0
    %1530 = vdwg.mxu0
    %v1531 = vsel %vm144, %v1450, -inf
    %1532 = vmax.xlane.f32.xlu0 %v1531
    %v1533 = vpop.xlane.xlu0 %1532
    %v1534 = vsel %vm144, %v1528, -inf
    %1535 = vmax.xlane.f32.xlu0 %v1534
    %v1536 = vpop.xlane.xlu0 %1535
    %v1537 = vsub.f32 %v1450, %v1533
    %v1538 = vsub.f32 %v1528, %v1536
    %v1539 = vmul.f32 %v1537, 1.442695
    %v1540 = vpow.pop %v1539
    %v1541 = vmul.f32 %v1538, 1.442695
    %v1542 = vpow.pop %v1541
    %v1543 = vsel %vm144, %v1540, 0.0
    %1544 = vadd.xlane.f32.xlu0 %v1543
    %v1545 = vpop.xlane.xlu0 %1544
    %v1546 = vsel %vm144, %v1542, 0.0
    %1547 = vadd.xlane.f32.xlu0 %v1546
    %v1548 = vpop.xlane.xlu0 %1547
    %v1549 = vrcp.pop %v1545
    %v1550 = vrcp.pop %v1548
    %v1551 = vmul.f32 %v1540, %v1549
    %v1552 = vmul.f32 %v1542, %v1550
    %1553 = vrot.lane.b32.xlu0 %v128, 40
    %v1554 = vpop.permute.xlu0 %1553
    %v1557 = vsel %vm144, %v1551, 0
    %1559 = vmatprep.subr.mxu0 0.0
    %1560 = vmatpush1.msra.mxu0 %v1554
    %1561 = vmatprep.subr.mxu0 0.0
    %1562 = vmatpush1.msra.mxu0 0.0
    %1563 = vmatprep.subr.mxu0 0.0
    %1564 = vmatpush1.msra.mxu0 0.0
    %1565 = vmatprep.subr.mxu0 0.0
    %1566 = vmatpush1.msra.mxu0 0.0
    %1567 = vmatprep.subr.mxu0 0.0
    %1568 = vmatpush1.msra.mxu0 0.0
    %1569 = vmatprep.subr.mxu0 0.0
    %1570 = vmatpush1.msra.mxu0 0.0
    %1571 = vmatprep.subr.mxu0 0.0
    %1572 = vmatpush1.msra.mxu0 0.0
    %1573 = vmatprep.subr.mxu0 0.0
    %1574 = vmatpush1.msra.mxu0 0.0
    %1575 = vmatprep.subr.mxu0 0.0
    %1576 = vmatpush1.msra.mxu0 0.0
    %1577 = vmatprep.subr.mxu0 0.0
    %1578 = vmatpush1.msra.mxu0 0.0
    %1579 = vmatprep.subr.mxu0 0.0
    %1580 = vmatpush1.msra.mxu0 0.0
    %1581 = vmatprep.subr.mxu0 0.0
    %1582 = vmatpush1.msra.mxu0 0.0
    %1583 = vmatprep.subr.mxu0 0.0
    %1584 = vmatpush1.msra.mxu0 0.0
    %1585 = vmatprep.subr.mxu0 0.0
    %1586 = vmatpush1.msra.mxu0 0.0
    %1587 = vmatprep.subr.mxu0 0.0
    %1588 = vmatpush1.msra.mxu0 0.0
    %1589 = vmatprep.subr.mxu0 0.0
    %1590 = vmatpush1.msra.mxu0 0.0
    %1591 = vmatprep.subr.mxu0 0.0
    %1592 = vmatpush1.msra.mxu0 0.0
    %1593 = vmatprep.subr.mxu0 0.0
    %1594 = vmatpush1.msra.mxu0 0.0
    %1595 = vmatprep.subr.mxu0 0.0
    %1596 = vmatpush1.msra.mxu0 0.0
    %1597 = vmatprep.subr.mxu0 0.0
    %1598 = vmatpush1.msra.mxu0 0.0
    %1599 = vmatprep.subr.mxu0 0.0
    %1600 = vmatpush1.msra.mxu0 0.0
    %1601 = vmatprep.subr.mxu0 0.0
    %1602 = vmatpush1.msra.mxu0 0.0
    %1603 = vmatprep.subr.mxu0 0.0
    %1604 = vmatpush1.msra.mxu0 0.0
    %1605 = vmatprep.subr.mxu0 0.0
    %1606 = vmatpush1.msra.mxu0 0.0
    %1607 = vmatprep.subr.mxu0 0.0
    %1608 = vmatpush1.msra.mxu0 0.0
    %1609 = vmatprep.subr.mxu0 0.0
    %1610 = vmatpush1.msra.mxu0 0.0
    %1611 = vmatprep.subr.mxu0 0.0
    %1612 = vmatpush1.msra.mxu0 0.0
    %1613 = vmatprep.subr.mxu0 0.0
    %1614 = vmatpush1.msra.mxu0 0.0
    %1615 = vmatprep.subr.mxu0 0.0
    %1616 = vmatpush1.msra.mxu0 0.0
    %1617 = vmatprep.subr.mxu0 0.0
    %1618 = vmatpush1.msra.mxu0 0.0
    %1619 = vmatprep.subr.mxu0 0.0
    %1620 = vmatpush1.msra.mxu0 0.0
    %1621 = vmatprep.subr.mxu0 0.0
    %1622 = vmatpush1.msra.mxu0 0.0
    %1623 = vmatprep.mubr.f32.mxu0 0.0
    %1624 = vmatmul.mubr.f32.gmra.mrb[0].mxu0 %v1557
    %v1625 = vpop.f32.mrb[0].mxu0
    %v1626 = vadd.f32 0.0, %v1625
    %v1627 = vpop.f32.mrb[0].mxu0
    %1628 = vdwg.mxu0
    %1629 = vrot.lane.b32.xlu0 %v133, 40
    %v1630 = vpop.permute.xlu0 %1629
    %v1633 = vsel %vm144, %v1552, 0
    %1635 = vmatprep.subr.mxu0 0.0
    %1636 = vmatpush1.msra.mxu0 %v1630
    %1637 = vmatprep.subr.mxu0 0.0
    %1638 = vmatpush1.msra.mxu0 0.0
    %1639 = vmatprep.subr.mxu0 0.0
    %1640 = vmatpush1.msra.mxu0 0.0
    %1641 = vmatprep.subr.mxu0 0.0
    %1642 = vmatpush1.msra.mxu0 0.0
    %1643 = vmatprep.subr.mxu0 0.0
    %1644 = vmatpush1.msra.mxu0 0.0
    %1645 = vmatprep.subr.mxu0 0.0
    %1646 = vmatpush1.msra.mxu0 0.0
    %1647 = vmatprep.subr.mxu0 0.0
    %1648 = vmatpush1.msra.mxu0 0.0
    %1649 = vmatprep.subr.mxu0 0.0
    %1650 = vmatpush1.msra.mxu0 0.0
    %1651 = vmatprep.subr.mxu0 0.0
    %1652 = vmatpush1.msra.mxu0 0.0
    %1653 = vmatprep.subr.mxu0 0.0
    %1654 = vmatpush1.msra.mxu0 0.0
    %1655 = vmatprep.subr.mxu0 0.0
    %1656 = vmatpush1.msra.mxu0 0.0
    %1657 = vmatprep.subr.mxu0 0.0
    %1658 = vmatpush1.msra.mxu0 0.0
    %1659 = vmatprep.subr.mxu0 0.0
    %1660 = vmatpush1.msra.mxu0 0.0
    %1661 = vmatprep.subr.mxu0 0.0
    %1662 = vmatpush1.msra.mxu0 0.0
    %1663 = vmatprep.subr.mxu0 0.0
    %1664 = vmatpush1.msra.mxu0 0.0
    %1665 = vmatprep.subr.mxu0 0.0
    %1666 = vmatpush1.msra.mxu0 0.0
    %1667 = vmatprep.subr.mxu0 0.0
    %1668 = vmatpush1.msra.mxu0 0.0
    %1669 = vmatprep.subr.mxu0 0.0
    %1670 = vmatpush1.msra.mxu0 0.0
    %1671 = vmatprep.subr.mxu0 0.0
    %1672 = vmatpush1.msra.mxu0 0.0
    %1673 = vmatprep.subr.mxu0 0.0
    %1674 = vmatpush1.msra.mxu0 0.0
    %1675 = vmatprep.subr.mxu0 0.0
    %1676 = vmatpush1.msra.mxu0 0.0
    %1677 = vmatprep.subr.mxu0 0.0
    %1678 = vmatpush1.msra.mxu0 0.0
    %1679 = vmatprep.subr.mxu0 0.0
    %1680 = vmatpush1.msra.mxu0 0.0
    %1681 = vmatprep.subr.mxu0 0.0
    %1682 = vmatpush1.msra.mxu0 0.0
    %1683 = vmatprep.subr.mxu0 0.0
    %1684 = vmatpush1.msra.mxu0 0.0
    %1685 = vmatprep.subr.mxu0 0.0
    %1686 = vmatpush1.msra.mxu0 0.0
    %1687 = vmatprep.subr.mxu0 0.0
    %1688 = vmatpush1.msra.mxu0 0.0
    %1689 = vmatprep.subr.mxu0 0.0
    %1690 = vmatpush1.msra.mxu0 0.0
    %1691 = vmatprep.subr.mxu0 0.0
    %1692 = vmatpush1.msra.mxu0 0.0
    %1693 = vmatprep.subr.mxu0 0.0
    %1694 = vmatpush1.msra.mxu0 0.0
    %1695 = vmatprep.subr.mxu0 0.0
    %1696 = vmatpush1.msra.mxu0 0.0
    %1697 = vmatprep.subr.mxu0 0.0
    %1698 = vmatpush1.msra.mxu0 0.0
    %1699 = vmatprep.mubr.f32.mxu0 0.0
    %1700 = vmatmul.mubr.f32.gmra.mrb[0].mxu0 %v1633
    %v1701 = vpop.f32.mrb[0].mxu0
    %v1702 = vadd.f32 0.0, %v1701
    %v1703 = vpop.f32.mrb[0].mxu0
    %1704 = vdwg.mxu0
    %v1706 = vsel %vm144, %v1626, 0
    %v1709 = vsel %vm144, %v1702, 0
    %1711 = vmatprep.subr.mxu0 0.0
    %1712 = vmatpush1.msra.mxu0 %v140
    %1713 = vmatprep.subr.mxu0 0.0
    %1714 = vmatpush1.msra.mxu0 0.0
    %1715 = vmatprep.subr.mxu0 0.0
    %1716 = vmatpush1.msra.mxu0 0.0
    %1717 = vmatprep.subr.mxu0 0.0
    %1718 = vmatpush1.msra.mxu0 0.0
    %1719 = vmatprep.subr.mxu0 0.0
    %1720 = vmatpush1.msra.mxu0 0.0
    %1721 = vmatprep.subr.mxu0 0.0
    %1722 = vmatpush1.msra.mxu0 0.0
    %1723 = vmatprep.subr.mxu0 0.0
    %1724 = vmatpush1.msra.mxu0 0.0
    %1725 = vmatprep.subr.mxu0 0.0
    %1726 = vmatpush1.msra.mxu0 0.0
    %1727 = vmatprep.subr.mxu0 0.0
    %1728 = vmatpush1.msra.mxu0 0.0
    %1729 = vmatprep.subr.mxu0 0.0
    %1730 = vmatpush1.msra.mxu0 0.0
    %1731 = vmatprep.subr.mxu0 0.0
    %1732 = vmatpush1.msra.mxu0 0.0
    %1733 = vmatprep.subr.mxu0 0.0
    %1734 = vmatpush1.msra.mxu0 0.0
    %1735 = vmatprep.subr.mxu0 0.0
    %1736 = vmatpush1.msra.mxu0 0.0
    %1737 = vmatprep.subr.mxu0 0.0
    %1738 = vmatpush1.msra.mxu0 0.0
    %1739 = vmatprep.subr.mxu0 0.0
    %1740 = vmatpush1.msra.mxu0 0.0
    %1741 = vmatprep.subr.mxu0 0.0
    %1742 = vmatpush1.msra.mxu0 0.0
    %1743 = vmatprep.subr.mxu0 0.0
    %1744 = vmatpush1.msra.mxu0 0.0
    %1745 = vmatprep.subr.mxu0 0.0
    %1746 = vmatpush1.msra.mxu0 0.0
    %1747 = vmatprep.subr.mxu0 0.0
    %1748 = vmatpush1.msra.mxu0 0.0
    %1749 = vmatprep.subr.mxu0 0.0
    %1750 = vmatpush1.msra.mxu0 0.0
    %1751 = vmatprep.subr.mxu0 0.0
    %1752 = vmatpush1.msra.mxu0 0.0
    %1753 = vmatprep.subr.mxu0 0.0
    %1754 = vmatpush1.msra.mxu0 0.0
    %1755 = vmatprep.subr.mxu0 0.0
    %1756 = vmatpush1.msra.mxu0 0.0
    %1757 = vmatprep.subr.mxu0 0.0
    %1758 = vmatpush1.msra.mxu0 0.0
    %1759 = vmatprep.subr.mxu0 0.0
    %1760 = vmatpush1.msra.mxu0 0.0
    %1761 = vmatprep.subr.mxu0 0.0
    %1762 = vmatpush1.msra.mxu0 0.0
    %1763 = vmatprep.subr.mxu0 0.0
    %1764 = vmatpush1.msra.mxu0 0.0
    %1765 = vmatprep.subr.mxu0 0.0
    %1766 = vmatpush1.msra.mxu0 0.0
    %1767 = vmatprep.subr.mxu0 0.0
    %1768 = vmatpush1.msra.mxu0 0.0
    %1769 = vmatprep.subr.mxu0 0.0
    %1770 = vmatpush1.msra.mxu0 0.0
    %1771 = vmatprep.subr.mxu0 0.0
    %1772 = vmatpush1.msra.mxu0 0.0
    %1773 = vmatprep.subr.mxu0 0.0
    %1774 = vmatpush1.msra.mxu0 0.0
    %1775 = vmatprep.mubr.f32.mxu0 0.0
    %1776 = vmatmul.mubr.f32.gmra.mrb[0].mxu0 %v1706
    %v1777 = vpop.f32.mrb[0].mxu0
    %v1778 = vadd.f32 0.0, %v1777
    %v1779 = vpop.f32.mrb[0].mxu0
    %1780 = vmatprep.mubr.f32.mxu0 0.0
    %1781 = vmatmul.mubr.f32.gmra.mrb[0].mxu0 %v1709
    %v1782 = vpop.f32.mrb[0].mxu0
    %v1783 = vadd.f32 0.0, %v1782
    %v1784 = vpop.f32.mrb[0].mxu0
    %1785 = vdwg.mxu0
    %v1786 = vadd.f32 %v1373, %v1778
    %v1787 = vadd.f32 %v1374, %v1783
    %v1788 = vlaneseq
    %v1789 = vshrl.u32 %v1788, 7
    %v1790 = vsub.s32 0, %v1789
    %v1791 = vrot.slane %v39, %v1790
    %v1792 = vadd.f32 %v1786, %v1791
    %v1793 = vadd.f32 %v1787, %v1791
    %v1794 = vadd.f32 %v36, %v1792
    %v1795 = vadd.f32 %v37, %v1793
    %v1796 = vsel %vm54, %v1794, 0.0
    %1797 = vadd.xlane.f32.xlu0 %v1796
    %v1798 = vpop.xlane.xlu0 %1797
    %v1799 = vsel %vm54, %v1795, 0.0
    %1800 = vadd.xlane.f32.xlu0 %v1799
    %v1801 = vpop.xlane.xlu0 %1800
    %v1802 = vrcp.pop 32.0
    %v1803 = vmul.f32 %v1798, %v1802
    %v1804 = vmul.f32 %v1801, %v1802
    %v1805 = vsub.f32 %v1794, %v1803
    %v1806 = vsub.f32 %v1795, %v1804
    %v1807 = vmul.f32 %v1805, %v1805
    %v1808 = vmul.f32 %v1806, %v1806
    %v1809 = vsel %vm54, %v1807, 0.0
    %1810 = vadd.xlane.f32.xlu0 %v1809
    %v1811 = vpop.xlane.xlu0 %1810
    %v1812 = vsel %vm54, %v1808, 0.0
    %1813 = vadd.xlane.f32.xlu0 %v1812
    %v1814 = vpop.xlane.xlu0 %1813
    %v1815 = vmul.f32 %v1811, %v1802
    %v1816 = vmul.f32 %v1814, %v1802
    %v1817 = vadd.f32 %v1815, 1e-05
    %v1818 = vadd.f32 %v1816, 1e-05
    %v1819 = vrsqrt.pop %v1817
    %v1820 = vrsqrt.pop %v1818
    %v1821 = vmul.f32 %v1805, %v1819
    %v1822 = vmul.f32 %v1806, %v1820
    %v1823 = vlaneseq
    %v1824 = vshrl.u32 %v1823, 7
    %v1825 = vsub.s32 0, %v1824
    %v1826 = vrot.slane %v40, %v1825
    %v1827 = vmul.f32 %v1821, %v1826
    %v1828 = vmul.f32 %v1822, %v1826
    %v1829 = vlaneseq
    %v1830 = vshrl.u32 %v1829, 7
    %v1831 = vsub.s32 0, %v1830
    %v1832 = vrot.slane %v41, %v1831
    %v1833 = vadd.f32 %v1827, %v1832
    %v1834 = vadd.f32 %v1828, %v1832
    %v1835 = vld [vmem:[%s4] sm:$0xff]
    %v1836 = vld [vmem:[%s4 + $0x8] sm:$0xff]
    %v1837 = vld [vmem:[%s4 + $0x10] sm:$0xff]
    %v1838 = vld [vmem:[%s4 + $0x18] sm:$0xff]
    %v1839 = vlaneseq
    %v1840 = vshrl.u32 %v1839, 7
    %v1841 = vsub.s32 0, %v1840
    %v1842 = vrot.slane %v44, %v1841
    %v1844 = vsel %vm54, %v1833, 0
    %v1847 = vsel %vm54, %v1834, 0
    %1849 = vmatprep.subr.mxu0 0.0
    %1850 = vmatpush1.msra.mxu0 %v1835
    %1851 = vmatprep.subr.mxu0 0.0
    %1852 = vmatpush1.msra.mxu0 %v1836
    %1853 = vmatprep.subr.mxu0 0.0
    %1854 = vmatpush1.msra.mxu0 %v1837
    %1855 = vmatprep.subr.mxu0 0.0
    %1856 = vmatpush1.msra.mxu0 %v1838
    %1857 = vmatprep.subr.mxu0 0.0
    %1858 = vmatpush1.msra.mxu0 0.0
    %1859 = vmatprep.subr.mxu0 0.0
    %1860 = vmatpush1.msra.mxu0 0.0
    %1861 = vmatprep.subr.mxu0 0.0
    %1862 = vmatpush1.msra.mxu0 0.0
    %1863 = vmatprep.subr.mxu0 0.0
    %1864 = vmatpush1.msra.mxu0 0.0
    %1865 = vmatprep.subr.mxu0 0.0
    %1866 = vmatpush1.msra.mxu0 0.0
    %1867 = vmatprep.subr.mxu0 0.0
    %1868 = vmatpush1.msra.mxu0 0.0
    %1869 = vmatprep.subr.mxu0 0.0
    %1870 = vmatpush1.msra.mxu0 0.0
    %1871 = vmatprep.subr.mxu0 0.0
    %1872 = vmatpush1.msra.mxu0 0.0
    %1873 = vmatprep.subr.mxu0 0.0
    %1874 = vmatpush1.msra.mxu0 0.0
    %1875 = vmatprep.subr.mxu0 0.0
    %1876 = vmatpush1.msra.mxu0 0.0
    %1877 = vmatprep.subr.mxu0 0.0
    %1878 = vmatpush1.msra.mxu0 0.0
    %1879 = vmatprep.subr.mxu0 0.0
    %1880 = vmatpush1.msra.mxu0 0.0
    %1881 = vmatprep.subr.mxu0 0.0
    %1882 = vmatpush1.msra.mxu0 0.0
    %1883 = vmatprep.subr.mxu0 0.0
    %1884 = vmatpush1.msra.mxu0 0.0
    %1885 = vmatprep.subr.mxu0 0.0
    %1886 = vmatpush1.msra.mxu0 0.0
    %1887 = vmatprep.subr.mxu0 0.0
    %1888 = vmatpush1.msra.mxu0 0.0
    %1889 = vmatprep.subr.mxu0 0.0
    %1890 = vmatpush1.msra.mxu0 0.0
    %1891 = vmatprep.subr.mxu0 0.0
    %1892 = vmatpush1.msra.mxu0 0.0
    %1893 = vmatprep.subr.mxu0 0.0
    %1894 = vmatpush1.msra.mxu0 0.0
    %1895 = vmatprep.subr.mxu0 0.0
    %1896 = vmatpush1.msra.mxu0 0.0
    %1897 = vmatprep.subr.mxu0 0.0
    %1898 = vmatpush1.msra.mxu0 0.0
    %1899 = vmatprep.subr.mxu0 0.0
    %1900 = vmatpush1.msra.mxu0 0.0
    %1901 = vmatprep.subr.mxu0 0.0
    %1902 = vmatpush1.msra.mxu0 0.0
    %1903 = vmatprep.subr.mxu0 0.0
    %1904 = vmatpush1.msra.mxu0 0.0
    %1905 = vmatprep.subr.mxu0 0.0
    %1906 = vmatpush1.msra.mxu0 0.0
    %1907 = vmatprep.subr.mxu0 0.0
    %1908 = vmatpush1.msra.mxu0 0.0
    %1909 = vmatprep.subr.mxu0 0.0
    %1910 = vmatpush1.msra.mxu0 0.0
    %1911 = vmatprep.subr.mxu0 0.0
    %1912 = vmatpush1.msra.mxu0 0.0
    %1913 = vmatprep.mubr.f32.mxu0 0.0
    %1914 = vmatmul.mubr.f32.gmra.mrb[0].mxu0 %v1844
    %v1915 = vpop.f32.mrb[0].mxu0
    %v1916 = vadd.f32 %v1842, %v1915
    %v1917 = vpop.f32.mrb[0].mxu0
    %1918 = vmatprep.mubr.f32.mxu0 0.0
    %1919 = vmatmul.mubr.f32.gmra.mrb[0].mxu0 %v1847
    %v1920 = vpop.f32.mrb[0].mxu0
    %v1921 = vadd.f32 %v1842, %v1920
    %v1922 = vpop.f32.mrb[0].mxu0
    %1923 = vdwg.mxu0
    %v1924 = vmax.f32 %v1916, 0.0
    %v1925 = vmax.f32 %v1921, 0.0
    %v1926 = vld [vmem:[%s5] sm:$0xff]
    %v1927 = vld [vmem:[%s5 + $0x8] sm:$0xff]
    %v1928 = vld [vmem:[%s5 + $0x10] sm:$0xff]
    %v1929 = vld [vmem:[%s5 + $0x18] sm:$0xff]
    %v1930 = vld [vmem:[%s5 + $0x20] sm:$0xff]
    %v1931 = vld [vmem:[%s5 + $0x28] sm:$0xff]
    %v1932 = vld [vmem:[%s5 + $0x30] sm:$0xff]
    %v1933 = vld [vmem:[%s5 + $0x38] sm:$0xff]
    %v1934 = vld [vmem:[%s5 + $0x40] sm:$0xff]
    %v1935 = vld [vmem:[%s5 + $0x48] sm:$0xff]
    %v1936 = vld [vmem:[%s5 + $0x50] sm:$0xff]
    %v1937 = vld [vmem:[%s5 + $0x58] sm:$0xff]
    %v1938 = vld [vmem:[%s5 + $0x60] sm:$0xff]
    %v1939 = vld [vmem:[%s5 + $0x68] sm:$0xff]
    %v1940 = vld [vmem:[%s5 + $0x70] sm:$0xff]
    %v1941 = vld [vmem:[%s5 + $0x78] sm:$0xff]
    %v1942 = vlaneseq
    %v1943 = vshrl.u32 %v1942, 7
    %v1944 = vsub.s32 0, %v1943
    %v1945 = vrot.slane %v45, %v1944
    %1946 = vmatprep.subr.mxu0 0.0
    %1947 = vmatpush1.msra.mxu0 %v1926
    %1948 = vmatprep.subr.mxu0 0.0
    %1949 = vmatpush1.msra.mxu0 %v1927
    %1950 = vmatprep.subr.mxu0 0.0
    %1951 = vmatpush1.msra.mxu0 %v1928
    %1952 = vmatprep.subr.mxu0 0.0
    %1953 = vmatpush1.msra.mxu0 %v1929
    %1954 = vmatprep.subr.mxu0 0.0
    %1955 = vmatpush1.msra.mxu0 %v1930
    %1956 = vmatprep.subr.mxu0 0.0
    %1957 = vmatpush1.msra.mxu0 %v1931
    %1958 = vmatprep.subr.mxu0 0.0
    %1959 = vmatpush1.msra.mxu0 %v1932
    %1960 = vmatprep.subr.mxu0 0.0
    %1961 = vmatpush1.msra.mxu0 %v1933
    %1962 = vmatprep.subr.mxu0 0.0
    %1963 = vmatpush1.msra.mxu0 %v1934
    %1964 = vmatprep.subr.mxu0 0.0
    %1965 = vmatpush1.msra.mxu0 %v1935
    %1966 = vmatprep.subr.mxu0 0.0
    %1967 = vmatpush1.msra.mxu0 %v1936
    %1968 = vmatprep.subr.mxu0 0.0
    %1969 = vmatpush1.msra.mxu0 %v1937
    %1970 = vmatprep.subr.mxu0 0.0
    %1971 = vmatpush1.msra.mxu0 %v1938
    %1972 = vmatprep.subr.mxu0 0.0
    %1973 = vmatpush1.msra.mxu0 %v1939
    %1974 = vmatprep.subr.mxu0 0.0
    %1975 = vmatpush1.msra.mxu0 %v1940
    %1976 = vmatprep.subr.mxu0 0.0
    %1977 = vmatpush1.msra.mxu0 %v1941
    %1978 = vmatprep.subr.mxu0 0.0
    %1979 = vmatpush1.msra.mxu0 0.0
    %1980 = vmatprep.subr.mxu0 0.0
    %1981 = vmatpush1.msra.mxu0 0.0
    %1982 = vmatprep.subr.mxu0 0.0
    %1983 = vmatpush1.msra.mxu0 0.0
    %1984 = vmatprep.subr.mxu0 0.0
    %1985 = vmatpush1.msra.mxu0 0.0
    %1986 = vmatprep.subr.mxu0 0.0
    %1987 = vmatpush1.msra.mxu0 0.0
    %1988 = vmatprep.subr.mxu0 0.0
    %1989 = vmatpush1.msra.mxu0 0.0
    %1990 = vmatprep.subr.mxu0 0.0
    %1991 = vmatpush1.msra.mxu0 0.0
    %1992 = vmatprep.subr.mxu0 0.0
    %1993 = vmatpush1.msra.mxu0 0.0
    %1994 = vmatprep.subr.mxu0 0.0
    %1995 = vmatpush1.msra.mxu0 0.0
    %1996 = vmatprep.subr.mxu0 0.0
    %1997 = vmatpush1.msra.mxu0 0.0
    %1998 = vmatprep.subr.mxu0 0.0
    %1999 = vmatpush1.msra.mxu0 0.0
    %2000 = vmatprep.subr.mxu0 0.0
    %2001 = vmatpush1.msra.mxu0 0.0
    %2002 = vmatprep.subr.mxu0 0.0
    %2003 = vmatpush1.msra.mxu0 0.0
    %2004 = vmatprep.subr.mxu0 0.0
    %2005 = vmatpush1.msra.mxu0 0.0
    %2006 = vmatprep.subr.mxu0 0.0
    %2007 = vmatpush1.msra.mxu0 0.0
    %2008 = vmatprep.subr.mxu0 0.0
    %2009 = vmatpush1.msra.mxu0 0.0
    %2010 = vmatprep.mubr.f32.mxu0 0.0
    %2011 = vmatmul.mubr.f32.gmra.mrb[0].mxu0 %v1924
    %v2012 = vpop.f32.mrb[0].mxu0
    %v2013 = vadd.f32 %v1945, %v2012
    %v2014 = vpop.f32.mrb[0].mxu0
    %2015 = vmatprep.mubr.f32.mxu0 0.0
    %2016 = vmatmul.mubr.f32.gmra.mrb[0].mxu0 %v1925
    %v2017 = vpop.f32.mrb[0].mxu0
    %v2018 = vadd.f32 %v1945, %v2017
    %v2019 = vpop.f32.mrb[0].mxu0
    %2020 = vdwg.mxu0
    %v2021 = vadd.f32 %v1833, %v2013
    %v2022 = vadd.f32 %v1834, %v2018
    %v2023 = vsel %vm54, %v2021, 0.0
    %2024 = vadd.xlane.f32.xlu0 %v2023
    %v2025 = vpop.xlane.xlu0 %2024
    %v2026 = vsel %vm54, %v2022, 0.0
    %2027 = vadd.xlane.f32.xlu0 %v2026
    %v2028 = vpop.xlane.xlu0 %2027
    %v2029 = vmul.f32 %v2025, %v1802
    %v2030 = vmul.f32 %v2028, %v1802
    %v2031 = vsub.f32 %v2021, %v2029
    %v2032 = vsub.f32 %v2022, %v2030
    %v2033 = vmul.f32 %v2031, %v2031
    %v2034 = vmul.f32 %v2032, %v2032
    %v2035 = vsel %vm54, %v2033, 0.0
    %2036 = vadd.xlane.f32.xlu0 %v2035
    %v2037 = vpop.xlane.xlu0 %2036
    %v2038 = vsel %vm54, %v2034, 0.0
    %2039 = vadd.xlane.f32.xlu0 %v2038
    %v2040 = vpop.xlane.xlu0 %2039
    %v2041 = vmul.f32 %v2037, %v1802
    %v2042 = vmul.f32 %v2040, %v1802
    %v2043 = vadd.f32 %v2041, 1e-05
    %v2044 = vadd.f32 %v2042, 1e-05
    %v2045 = vrsqrt.pop %v2043
    %v2046 = vrsqrt.pop %v2044
    %v2047 = vmul.f32 %v2031, %v2045
    %v2048 = vmul.f32 %v2032, %v2046
    %v2049 = vlaneseq
    %v2050 = vshrl.u32 %v2049, 7
    %v2051 = vsub.s32 0, %v2050
    %v2052 = vrot.slane %v42, %v2051
    %v2053 = vmul.f32 %v2047, %v2052
    %v2054 = vmul.f32 %v2048, %v2052
    %v2055 = vlaneseq
    %v2056 = vshrl.u32 %v2055, 7
    %v2057 = vsub.s32 0, %v2056
    %v2058 = vrot.slane %v43, %v2057
    %v2059 = vadd.f32 %v2053, %v2058
    %v2060 = vadd.f32 %v2054, %v2058
    %2061 = vst.msk [vmem:[#allocation2] sm:$0xff] %vm54, %v2059
    %2062 = vst.msk [vmem:[#allocation2 + $0x8] sm:$0xff] %vm54, %v2060
    // Predicated region
    $region34: #{tpu_custom_call.1} parent=1 // pred_check
      _
    $region35: #{tpu_custom_call.1} parent=1 // pred_check_branch
      %2064 = sbr.rel (0) target = $region37
    $region36: #{tpu_custom_call.1} parent=1 // pred_region
      %s2066 = ssub.s32 256, 256
      %2067 = vsyncadd [#allocation3], %s2066
      %s2068 = sshll.u32 [#allocation2], 4
      %s2069 = int_to_ptr.vmem [resolvable:$true] %s2068
      %2074 = dma.vmem_to_hbm [thread:$0]  %s2069, 256, %s7, [#allocation3], 128, 128, 8
    $region37: #{tpu_custom_call.1} parent=1 // pred_fallthru
      _
    // Predicated region
    $region38: #{tpu_custom_call.1} parent=1 // pred_check
      _
    $region39: #{tpu_custom_call.1} parent=1 // pred_check_branch
      %2076 = sbr.rel (0) target = $region41
    $region40: #{tpu_custom_call.1} parent=1 // pred_region
      %2077 = dma.done [#allocation3], 256
    $region41: #{tpu_custom_call.1} parent=1 // pred_fallthru
      _
    %2078 = vsyncpa [#allocation3], 1

</llo_original>
